<compile_context>
chip_gen: v7x
topology: tpu7x:2x2x1
jax: 0.10.0
libtpu: 0.0.40
codegen_flags: <defaults>
</compile_context>

<pallas_src>
import functools

import jax
import jax.numpy as jnp
from jax.experimental import pallas as pl
from jax.experimental.pallas import tpu as pltpu


def _round_up(x: int, m: int) -> int:
    return (x + m - 1) // m * m


def _dims(input_size: int, hidden_size: int, output_size: int):
    H = hidden_size
    P = max(input_size, H)             # padded width of the "input" half of the fused vector
    R = _round_up(P + H + 1, 8)        # rows of a per-layer slab: [W_ih^T ; W_hh^T ; bias ; pad]
    RO = _round_up(H + 1, 8)           # rows of the output slab: [W_out^T ; b_out ; pad]
    OP = _round_up(output_size, 128)   # lane-dense per-step output width
    SW = _round_up(2 * H, 128)         # lane-dense packed state width: [h | c | pad]
    return P, R, RO, OP, SW


# ---------------------------------------------------------------------------
# One-time parameter packing (replaces the per-call transposes of the old code)
# ---------------------------------------------------------------------------
def prepare_params(params, input_size, hidden_size, output_size, num_layers):
    H = hidden_size
    P, R, RO, OP, _ = _dims(input_size, hidden_size, output_size)
    slabs = []
    for layer in range(num_layers):
        w_ih, w_hh, b_ih, b_hh = params[f"layer{layer}"]
        in_l = w_ih.shape[1]
        slab = jnp.zeros((R, 4 * H), jnp.float32)
        slab = slab.at[:in_l, :].set(jnp.transpose(w_ih))    # rows [0, in_l)      : W_ih^T
        slab = slab.at[P:P + H, :].set(jnp.transpose(w_hh))  # rows [P, P+H)       : W_hh^T
        slab = slab.at[P + H, :].set(b_ih + b_hh)            # row  P+H            : fused bias
        slabs.append(slab)
    w_pack = jnp.stack(slabs, axis=0)                        # (L, R, 4H)

    w_out, b_out = params["out"]
    wo_pack = jnp.zeros((RO, OP), jnp.float32)
    wo_pack = wo_pack.at[:H, :output_size].set(jnp.transpose(w_out))
    wo_pack = wo_pack.at[H, :output_size].set(b_out)
    # NOTE: casting the slabs (and the in-kernel dot operands) to bfloat16 would halve
    # weight-DMA bytes and MXU passes on v5e/v6e/v7x; kept f32 so the tight check
    # against the f32 reference holds.
    return w_pack, wo_pack


def init_state(num_layers, hidden_size):
    """Equivalent of LSTMNetwork.reset(): zero packed [h | c | pad] state."""
    SW = _round_up(2 * hidden_size, 128)
    return jnp.zeros((num_layers, 1, SW), jnp.float32)


def unpack_state(state, hidden_size):
    H = hidden_size
    return state[:, :, :H], state[:, :, H:2 * H]


# ---------------------------------------------------------------------------
# Kernel: multi-layer LSTM step, iterated over time by the grid
# ---------------------------------------------------------------------------
def _make_kernel(num_layers, input_size, hidden_size, output_size):
    H = hidden_size
    P, R, RO, OP, SW = _dims(input_size, hidden_size, output_size)
    HIGH = jax.lax.Precision.HIGHEST

    def kernel(x_ref, stin_ref, wp_ref, wo_ref, y_ref, st_ref):
        # x_ref   : (1, P)       timestep input (zero-padded to P lanes)
        # stin_ref: (L, 1, SW)   initial packed state (VMEM-resident across the grid)
        # wp_ref  : (L, R, 4H)   packed per-layer weights (resident)
        # wo_ref  : (RO, OP)     packed output layer (resident)
        # y_ref   : (1, OP)      this step's activated output (lane-dense)
        # st_ref  : (L, 1, SW)   packed state carry; lives in the output block, written
        #                        back to HBM once after the last grid step.
        t = pl.program_id(0)

        @pl.when(t == 0)
        def _():
            st_ref[...] = stin_ref[...]          # load initial h/c once

        inp = x_ref[...]                         # (1, P)
        for layer in range(num_layers):
            slab = wp_ref[layer]                 # (R, 4H)
            row = st_ref[layer]                  # (1, SW)
            h_prev = row[:, :H]
            c_prev = row[:, H:2 * H]

            # fused matmul: [x | h_prev] @ [W_ih^T ; W_hh^T]  + bias row
            vec = jnp.concatenate([inp, h_prev], axis=-1)            # (1, P+H)
            z = jnp.dot(vec, slab[:P + H, :],
                        preferred_element_type=jnp.float32,
                        precision=HIGH) + slab[P + H:P + H + 1, :]   # (1, 4H)

            # full-width transcendentals (EUP), then lane-sliced gates [i, f, g, o]
            s = jax.nn.sigmoid(z)
            tz = jnp.tanh(z)
            i_g = s[:, 0 * H:1 * H]
            f_g = s[:, 1 * H:2 * H]
            g_g = tz[:, 2 * H:3 * H]
            o_g = s[:, 3 * H:4 * H]

            c_new = f_g * c_prev + i_g * g_g
            h_new = o_g * jnp.tanh(c_new)

            # lane-dense state row: one full-width store of [h | c | 0]
            pieces = [h_new, c_new]
            if SW > 2 * H:
                pieces.append(jnp.zeros((1, SW - 2 * H), jnp.float32))
            st_ref[layer] = jnp.concatenate(pieces, axis=-1)

            if P > H:  # only when input_size > hidden_size
                inp = jnp.concatenate([h_new, jnp.zeros((1, P - H), jnp.float32)], axis=-1)
            else:
                inp = h_new

        # output layer (+ bias row) and output activation
        wo = wo_ref[...]                         # (RO, OP)
        y = jnp.dot(inp[:, :H], wo[:H, :],
                    preferred_element_type=jnp.float32,
                    precision=HIGH) + wo[H:H + 1, :]
        # TODO(synk): output_activation assumed Tanh (config.output_activation unspecified).
        y_ref[...] = jnp.tanh(y)

    return kernel


def _lstm_seq_pallas(xs_pad, state, w_pack, wo_pack, *,
                     num_layers, input_size, hidden_size, output_size):
    T = xs_pad.shape[0]
    H = hidden_size
    L = num_layers
    P, R, RO, OP, SW = _dims(input_size, hidden_size, output_size)

    kernel = _make_kernel(L, input_size, H, output_size)

    in_specs = [
        pl.BlockSpec((None, 1, P), lambda t: (t, 0, 0)),     # x_t (per-step tile)
        pl.BlockSpec((L, 1, SW), lambda t: (0, 0, 0)),       # initial state (resident)
        pl.BlockSpec((L, R, 4 * H), lambda t: (0, 0, 0)),    # LSTM weight slabs (resident)
        pl.BlockSpec((RO, OP), lambda t: (0, 0)),            # output-layer slab (resident)
    ]
    out_specs = (
        pl.BlockSpec((None, 1, OP), lambda t: (t, 0, 0)),    # y_t (per-step tile)
        pl.BlockSpec((L, 1, SW), lambda t: (0, 0, 0)),       # state carry / final state
    )
    out_shape = (
        jax.ShapeDtypeStruct((T, 1, OP), jnp.float32),
        jax.ShapeDtypeStruct((L, 1, SW), jnp.float32),
    )
    return pl.pallas_call(
        kernel,
        grid=(T,),
        in_specs=in_specs,
        out_specs=out_specs,
        out_shape=out_shape,
        input_output_aliases={1: 1},            # update the packed state in place
        compiler_params=pltpu.CompilerParams(
            dimension_semantics=("arbitrary",)),  # timesteps are sequential (carried state)
    )(xs_pad, state, w_pack, wo_pack)


def _pad_lanes(xs3, input_size, P):
    if P > input_size:
        xs3 = jnp.pad(xs3, ((0, 0), (0, 0), (0, P - input_size)))
    return xs3


# ---------------------------------------------------------------------------
# Public wrappers
# ---------------------------------------------------------------------------
@functools.partial(jax.jit, static_argnames=("hidden_size", "output_size"),
                   donate_argnums=(1,))
def lstm_network_forward(x, state, w_pack, wo_pack, *, hidden_size, output_size):
    """Single timestep == LSTMNetwork.forward(x); `state` is the packed (L,1,SW) hidden."""
    input_size = x.size
    P, _, _, _, _ = _dims(input_size, hidden_size, output_size)
    xs3 = _pad_lanes(x.reshape(1, 1, input_size).astype(jnp.float32), input_size, P)
    num_layers = state.shape[0]
    ys, st = _lstm_seq_pallas(xs3, state, w_pack, wo_pack,
                              num_layers=num_layers, input_size=input_size,
                              hidden_size=hidden_size, output_size=output_size)
    y = ys[:, :, :output_size].reshape(1, 1, output_size)
    return y, st


@functools.partial(jax.jit, static_argnames=("hidden_size", "output_size"),
                   donate_argnums=(1,))
def lstm_network_forward_seq(xs, state, w_pack, wo_pack, *, hidden_size, output_size):
    """T timesteps in ONE pallas_call (grid=(T,)); equivalent to T calls of forward()."""
    T, input_size = xs.shape
    P, _, _, _, _ = _dims(input_size, hidden_size, output_size)
    xs3 = _pad_lanes(xs.reshape(T, 1, input_size).astype(jnp.float32), input_size, P)
    num_layers = state.shape[0]
    ys, st = _lstm_seq_pallas(xs3, state, w_pack, wo_pack,
                              num_layers=num_layers, input_size=input_size,
                              hidden_size=hidden_size, output_size=output_size)
    return ys[:, :, :output_size], st


# ---------------------------------------------------------------------------
# Init + pure-JAX reference (full f32 precision) for correctness checking
# ---------------------------------------------------------------------------
def _init_params(key, input_size, hidden_size, output_size, num_layers):
    params = {}
    k = 1.0 / jnp.sqrt(hidden_size)
    for layer in range(num_layers):
        in_l = input_size if layer == 0 else hidden_size
        key, k1, k2, k3, k4 = jax.random.split(key, 5)
        params[f"layer{layer}"] = (
            jax.random.uniform(k1, (4 * hidden_size, in_l), jnp.float32, -k, k),         # w_ih
            jax.random.uniform(k2, (4 * hidden_size, hidden_size), jnp.float32, -k, k),  # w_hh
            jax.random.uniform(k3, (4 * hidden_size,), jnp.float32, -k, k),              # b_ih
            jax.random.uniform(k4, (4 * hidden_size,), jnp.float32, -k, k),              # b_hh
        )
    key, k1, k2 = jax.random.split(key, 3)
    params["out"] = (
        jax.random.uniform(k1, (output_size, hidden_size), jnp.float32, -k, k),  # w_out
        jax.random.uniform(k2, (output_size,), jnp.float32, -k, k),              # b_out
    )
    return params


def _reference_forward(x, h, c, params, num_layers):
    hp = jax.lax.Precision.HIGHEST
    inp = x.reshape(1, -1)
    h_new, c_new = [], []
    for layer in range(num_layers):
        w_ih, w_hh, b_ih, b_hh = params[f"layer{layer}"]
        z = (jnp.dot(inp, w_ih.T, precision=hp)
             + jnp.dot(h[layer], w_hh.T, precision=hp) + b_ih + b_hh)
        H = w_hh.shape[1]
        i_g = jax.nn.sigmoid(z[:, 0 * H:1 * H])
        f_g = jax.nn.sigmoid(z[:, 1 * H:2 * H])
        g_g = jnp.tanh(z[:, 2 * H:3 * H])
        o_g = jax.nn.sigmoid(z[:, 3 * H:4 * H])
        cn = f_g * c[layer] + i_g * g_g
        hn = o_g * jnp.tanh(cn)
        h_new.append(hn)
        c_new.append(cn)
        inp = hn
    w_out, b_out = params["out"]
    y = jnp.tanh(jnp.dot(inp, w_out.T, precision=hp) + b_out)
    return y.reshape(1, 1, -1), jnp.stack(h_new), jnp.stack(c_new)


if __name__ == "__main__":
    input_size = 16
    hidden_size = 32
    num_layers = 2
    output_size = 8

    key = jax.random.PRNGKey(0)
    key, pkey, xkey, skey = jax.random.split(key, 4)
    params = _init_params(pkey, input_size, hidden_size, output_size, num_layers)

    # one-time weight packing (transpose / fuse / pad) -- NOT in the per-call path
    w_pack, wo_pack = prepare_params(params, input_size, hidden_size,
                                     output_size, num_layers)
    jax.block_until_ready((w_pack, wo_pack))

    # ---- single step (module forward semantics) ----
    x = jax.random.normal(xkey, (input_size,), jnp.float32)
    state0 = init_state(num_layers, hidden_size)       # reset()
    y, state1 = lstm_network_forward(x, state0, w_pack, wo_pack,
                                     hidden_size=hidden_size, output_size=output_size)
    jax.block_until_ready((y, state1))

    h0 = jnp.zeros((num_layers, 1, hidden_size), jnp.float32)
    c0 = jnp.zeros((num_layers, 1, hidden_size), jnp.float32)
    y_ref, h_ref, c_ref = _reference_forward(x, h0, c0, params, num_layers)
    h1, c1 = unpack_state(state1, hidden_size)
    assert jnp.allclose(y, y_ref, atol=2e-5), "single-step output mismatch"
    assert jnp.allclose(h1, h_ref, atol=2e-5), "single-step hidden mismatch"
    assert jnp.allclose(c1, c_ref, atol=2e-5), "single-step cell mismatch"

    # ---- whole sequence in a single pallas_call (grid=(T,), resident weights/state) ----
    T = 8
    xs = jax.random.normal(skey, (T, input_size), jnp.float32)
    state_seq = init_state(num_layers, hidden_size)
    ys, state_T = lstm_network_forward_seq(xs, state_seq, w_pack, wo_pack,
                                           hidden_size=hidden_size,
                                           output_size=output_size)
    jax.block_until_ready((ys, state_T))

    h, c = h0, c0
    ys_ref = []
    for t in range(T):
        y_t, h, c = _reference_forward(xs[t], h, c, params, num_layers)
        ys_ref.append(y_t.reshape(1, output_size))
    ys_ref = jnp.stack(ys_ref, axis=0)                 # (T, 1, O)
    hT, cT = unpack_state(state_T, hidden_size)
    assert jnp.allclose(ys, ys_ref, atol=1e-4), "sequence output mismatch"
    assert jnp.allclose(hT, h, atol=1e-4), "sequence hidden mismatch"
    assert jnp.allclose(cT, c, atol=1e-4), "sequence cell mismatch"

    print("KERNEL_OK")
</pallas_src>

<mosaic_0001>
module attributes {stable_mosaic.version = 11 : i64} {
  func.func @kernel(%arg0: i32, %arg1: memref<1x1x32xf32, #tpu.memory_space<vmem>>, %arg2: memref<2x1x128xf32, #tpu.memory_space<vmem>>, %arg3: memref<2x72x128xf32, #tpu.memory_space<vmem>>, %arg4: memref<40x128xf32, #tpu.memory_space<vmem>>, %arg5: memref<1x1x128xf32, #tpu.memory_space<vmem>>, %arg6: memref<2x1x128xf32, #tpu.memory_space<vmem>>) attributes {dimension_semantics = [#tpu.dimension_semantics<arbitrary>], iteration_bounds = array<i64: 1>, scalar_prefetch = 0 : i64, scratch_operands = 0 : i64, tpu.core_type = #tpu.core_type<tc>, window_params = [{transform_indices = @transform_0, window_bounds = array<i64: 1, 1, 32>}, {pipeline_mode = #tpu.pipeline_mode<synchronous>, transform_indices = @transform_1, window_bounds = array<i64: 2, 1, 128>}, {pipeline_mode = #tpu.pipeline_mode<synchronous>, transform_indices = @transform_2, window_bounds = array<i64: 2, 72, 128>}, {pipeline_mode = #tpu.pipeline_mode<synchronous>, transform_indices = @transform_3, window_bounds = array<i64: 40, 128>}, {transform_indices = @transform_4, window_bounds = array<i64: 1, 1, 128>}, {pipeline_mode = #tpu.pipeline_mode<synchronous>, transform_indices = @transform_5, window_bounds = array<i64: 2, 1, 128>}]} {
    %c0_i32 = arith.constant 0 : i32
    %0 = arith.cmpi eq, %arg0, %c0_i32 : i32
    %1 = arith.extui %0 : i1 to i32
    %c0_i32_0 = arith.constant 0 : i32
    %2 = arith.cmpi ne, %1, %c0_i32_0 : i32
    scf.if %2 {
      %c0_31 = arith.constant 0 : index
      %c0_32 = arith.constant 0 : index
      %c0_33 = arith.constant 0 : index
      %76 = vector.load %arg2[%c0_31, %c0_32, %c0_33] : memref<2x1x128xf32, #tpu.memory_space<vmem>>, vector<2x1x128xf32>
      %c0_34 = arith.constant 0 : index
      %c0_35 = arith.constant 0 : index
      %c0_36 = arith.constant 0 : index
      %77 = vector.load %arg6[%c0_34, %c0_35, %c0_36] : memref<2x1x128xf32, #tpu.memory_space<vmem>>, vector<2x1x128xf32>
      tpu.vector_store %arg6[%c0_34, %c0_35, %c0_36], %76 {strides = array<i32>} : memref<2x1x128xf32, #tpu.memory_space<vmem>>, vector<2x1x128xf32>,
    } else {
    }
    %c0 = arith.constant 0 : index
    %c0_1 = arith.constant 0 : index
    %c0_2 = arith.constant 0 : index
    %3 = vector.load %arg1[%c0, %c0_1, %c0_2] : memref<1x1x32xf32, #tpu.memory_space<vmem>>, vector<1x1x32xf32>
    %4 = vector.shape_cast %3 : vector<1x1x32xf32> to vector<1x32xf32>
    %c0_3 = arith.constant 0 : index
    %c0_4 = arith.constant 0 : index
    %c0_5 = arith.constant 0 : index
    %5 = vector.load %arg3[%c0_3, %c0_4, %c0_5] : memref<2x72x128xf32, #tpu.memory_space<vmem>>, vector<1x72x128xf32>
    %6 = vector.shape_cast %5 : vector<1x72x128xf32> to vector<72x128xf32>
    %c0_6 = arith.constant 0 : index
    %c0_7 = arith.constant 0 : index
    %c0_8 = arith.constant 0 : index
    %7 = vector.load %arg6[%c0_6, %c0_7, %c0_8] : memref<2x1x128xf32, #tpu.memory_space<vmem>>, vector<1x1x128xf32>
    %8 = vector.shape_cast %7 : vector<1x1x128xf32> to vector<1x128xf32>
    %9 = vector.extract_strided_slice %8 {offsets = [0, 0], sizes = [1, 32], strides = [1, 1]} : vector<1x128xf32> to vector<1x32xf32>
    %10 = vector.extract_strided_slice %8 {offsets = [0, 32], sizes = [1, 32], strides = [1, 1]} : vector<1x128xf32> to vector<1x32xf32>
    %11 = tpu.concatenate %4, %9 in 1 : vector<1x32xf32>, vector<1x32xf32> -> vector<1x64xf32>
    %12 = vector.extract_strided_slice %6 {offsets = [0, 0], sizes = [64, 128], strides = [1, 1]} : vector<72x128xf32> to vector<64x128xf32>
    %cst = arith.constant dense<0.000000e+00> : vector<1x128xf32>
    %13 = tpu.matmul %11, %12, %cst {dimension_numbers = #tpu.dot_dimension_numbers<[1], [0], [0], [1], [0, 0, 1, 1], [], []>, precision = #tpu.contract_precision<fp32>} : vector<1x64xf32>, vector<64x128xf32>, vector<1x128xf32> -> vector<1x128xf32>
    %14 = vector.extract_strided_slice %6 {offsets = [64, 0], sizes = [1, 128], strides = [1, 1]} : vector<72x128xf32> to vector<1x128xf32>
    %15 = arith.addf %13, %14 : vector<1x128xf32>
    %16 = arith.negf %15 : vector<1x128xf32>
    %17 = math.exp %16 : vector<1x128xf32>
    %cst_9 = arith.constant 1.000000e+00 : f32
    %18 = vector.broadcast %cst_9 : f32 to vector<1x128xf32>
    %19 = arith.addf %18, %17 : vector<1x128xf32>
    %20 = arith.divf %18, %19 : vector<1x128xf32>
    %21 = math.tanh %15 : vector<1x128xf32>
    %22 = vector.extract_strided_slice %20 {offsets = [0, 0], sizes = [1, 32], strides = [1, 1]} : vector<1x128xf32> to vector<1x32xf32>
    %23 = vector.extract_strided_slice %20 {offsets = [0, 32], sizes = [1, 32], strides = [1, 1]} : vector<1x128xf32> to vector<1x32xf32>
    %24 = vector.extract_strided_slice %21 {offsets = [0, 64], sizes = [1, 32], strides = [1, 1]} : vector<1x128xf32> to vector<1x32xf32>
    %25 = vector.extract_strided_slice %20 {offsets = [0, 96], sizes = [1, 32], strides = [1, 1]} : vector<1x128xf32> to vector<1x32xf32>
    %26 = arith.mulf %23, %10 : vector<1x32xf32>
    %27 = arith.mulf %22, %24 : vector<1x32xf32>
    %28 = arith.addf %26, %27 : vector<1x32xf32>
    %29 = math.tanh %28 : vector<1x32xf32>
    %30 = arith.mulf %25, %29 : vector<1x32xf32>
    %cst_10 = arith.constant 0.000000e+00 : f32
    %31 = vector.broadcast %cst_10 : f32 to vector<1x64xf32>
    %32 = tpu.concatenate %30, %28, %31 in 1 : vector<1x32xf32>, vector<1x32xf32>, vector<1x64xf32> -> vector<1x128xf32>
    %c0_11 = arith.constant 0 : index
    %c0_12 = arith.constant 0 : index
    %c0_13 = arith.constant 0 : index
    %33 = vector.load %arg6[%c0_11, %c0_12, %c0_13] : memref<2x1x128xf32, #tpu.memory_space<vmem>>, vector<1x1x128xf32>
    %34 = vector.shape_cast %33 : vector<1x1x128xf32> to vector<1x128xf32>
    %35 = vector.shape_cast %32 : vector<1x128xf32> to vector<1x1x128xf32>
    tpu.vector_store %arg6[%c0_11, %c0_12, %c0_13], %35 {strides = array<i32>} : memref<2x1x128xf32, #tpu.memory_space<vmem>>, vector<1x1x128xf32>,
    %c1 = arith.constant 1 : index
    %c0_14 = arith.constant 0 : index
    %c0_15 = arith.constant 0 : index
    %36 = vector.load %arg3[%c1, %c0_14, %c0_15] : memref<2x72x128xf32, #tpu.memory_space<vmem>>, vector<1x72x128xf32>
    %37 = vector.shape_cast %36 : vector<1x72x128xf32> to vector<72x128xf32>
    %c1_16 = arith.constant 1 : index
    %c0_17 = arith.constant 0 : index
    %c0_18 = arith.constant 0 : index
    %38 = vector.load %arg6[%c1_16, %c0_17, %c0_18] : memref<2x1x128xf32, #tpu.memory_space<vmem>>, vector<1x1x128xf32>
    %39 = vector.shape_cast %38 : vector<1x1x128xf32> to vector<1x128xf32>
    %40 = vector.extract_strided_slice %39 {offsets = [0, 0], sizes = [1, 32], strides = [1, 1]} : vector<1x128xf32> to vector<1x32xf32>
    %41 = vector.extract_strided_slice %39 {offsets = [0, 32], sizes = [1, 32], strides = [1, 1]} : vector<1x128xf32> to vector<1x32xf32>
    %42 = tpu.concatenate %30, %40 in 1 : vector<1x32xf32>, vector<1x32xf32> -> vector<1x64xf32>
    %43 = vector.extract_strided_slice %37 {offsets = [0, 0], sizes = [64, 128], strides = [1, 1]} : vector<72x128xf32> to vector<64x128xf32>
    %cst_19 = arith.constant dense<0.000000e+00> : vector<1x128xf32>
    %44 = tpu.matmul %42, %43, %cst_19 {dimension_numbers = #tpu.dot_dimension_numbers<[1], [0], [0], [1], [0, 0, 1, 1], [], []>, precision = #tpu.contract_precision<fp32>} : vector<1x64xf32>, vector<64x128xf32>, vector<1x128xf32> -> vector<1x128xf32>
    %45 = vector.extract_strided_slice %37 {offsets = [64, 0], sizes = [1, 128], strides = [1, 1]} : vector<72x128xf32> to vector<1x128xf32>
    %46 = arith.addf %44, %45 : vector<1x128xf32>
    %47 = arith.negf %46 : vector<1x128xf32>
    %48 = math.exp %47 : vector<1x128xf32>
    %cst_20 = arith.constant 1.000000e+00 : f32
    %49 = vector.broadcast %cst_20 : f32 to vector<1x128xf32>
    %50 = arith.addf %49, %48 : vector<1x128xf32>
    %51 = arith.divf %49, %50 : vector<1x128xf32>
    %52 = math.tanh %46 : vector<1x128xf32>
    %53 = vector.extract_strided_slice %51 {offsets = [0, 0], sizes = [1, 32], strides = [1, 1]} : vector<1x128xf32> to vector<1x32xf32>
    %54 = vector.extract_strided_slice %51 {offsets = [0, 32], sizes = [1, 32], strides = [1, 1]} : vector<1x128xf32> to vector<1x32xf32>
    %55 = vector.extract_strided_slice %52 {offsets = [0, 64], sizes = [1, 32], strides = [1, 1]} : vector<1x128xf32> to vector<1x32xf32>
    %56 = vector.extract_strided_slice %51 {offsets = [0, 96], sizes = [1, 32], strides = [1, 1]} : vector<1x128xf32> to vector<1x32xf32>
    %57 = arith.mulf %54, %41 : vector<1x32xf32>
    %58 = arith.mulf %53, %55 : vector<1x32xf32>
    %59 = arith.addf %57, %58 : vector<1x32xf32>
    %60 = math.tanh %59 : vector<1x32xf32>
    %61 = arith.mulf %56, %60 : vector<1x32xf32>
    %cst_21 = arith.constant 0.000000e+00 : f32
    %62 = vector.broadcast %cst_21 : f32 to vector<1x64xf32>
    %63 = tpu.concatenate %61, %59, %62 in 1 : vector<1x32xf32>, vector<1x32xf32>, vector<1x64xf32> -> vector<1x128xf32>
    %c1_22 = arith.constant 1 : index
    %c0_23 = arith.constant 0 : index
    %c0_24 = arith.constant 0 : index
    %64 = vector.load %arg6[%c1_22, %c0_23, %c0_24] : memref<2x1x128xf32, #tpu.memory_space<vmem>>, vector<1x1x128xf32>
    %65 = vector.shape_cast %64 : vector<1x1x128xf32> to vector<1x128xf32>
    %66 = vector.shape_cast %63 : vector<1x128xf32> to vector<1x1x128xf32>
    tpu.vector_store %arg6[%c1_22, %c0_23, %c0_24], %66 {strides = array<i32>} : memref<2x1x128xf32, #tpu.memory_space<vmem>>, vector<1x1x128xf32>,
    %c0_25 = arith.constant 0 : index
    %c0_26 = arith.constant 0 : index
    %67 = vector.load %arg4[%c0_25, %c0_26] : memref<40x128xf32, #tpu.memory_space<vmem>>, vector<40x128xf32>
    %68 = vector.extract_strided_slice %67 {offsets = [0, 0], sizes = [32, 128], strides = [1, 1]} : vector<40x128xf32> to vector<32x128xf32>
    %cst_27 = arith.constant dense<0.000000e+00> : vector<1x128xf32>
    %69 = tpu.matmul %61, %68, %cst_27 {dimension_numbers = #tpu.dot_dimension_numbers<[1], [0], [0], [1], [0, 0, 1, 1], [], []>, precision = #tpu.contract_precision<fp32>} : vector<1x32xf32>, vector<32x128xf32>, vector<1x128xf32> -> vector<1x128xf32>
    %70 = vector.extract_strided_slice %67 {offsets = [32, 0], sizes = [1, 128], strides = [1, 1]} : vector<40x128xf32> to vector<1x128xf32>
    %71 = arith.addf %69, %70 : vector<1x128xf32>
    %72 = math.tanh %71 : vector<1x128xf32>
    %c0_28 = arith.constant 0 : index
    %c0_29 = arith.constant 0 : index
    %c0_30 = arith.constant 0 : index
    %73 = vector.load %arg5[%c0_28, %c0_29, %c0_30] : memref<1x1x128xf32, #tpu.memory_space<vmem>>, vector<1x1x128xf32>
    %74 = vector.shape_cast %73 : vector<1x1x128xf32> to vector<1x128xf32>
    %75 = vector.shape_cast %72 : vector<1x128xf32> to vector<1x1x128xf32>
    tpu.vector_store %arg5[%c0_28, %c0_29, %c0_30], %75 {strides = array<i32>} : memref<1x1x128xf32, #tpu.memory_space<vmem>>, vector<1x1x128xf32>,
    return
  }
  func.func @transform_0(%arg0: i32) -> (i32, i32, i32) {
    %c0_i32 = arith.constant 0 : i32
    %c0_i32_0 = arith.constant 0 : i32
    %c0_i32_1 = arith.constant 0 : i32
    return %arg0, %c0_i32, %c0_i32_0 : i32, i32, i32
  }
  func.func @transform_1(%arg0: i32) -> (i32, i32, i32) {
    %c0_i32 = arith.constant 0 : i32
    %c0_i32_0 = arith.constant 0 : i32
    %c0_i32_1 = arith.constant 0 : i32
    %c0_i32_2 = arith.constant 0 : i32
    return %c0_i32, %c0_i32_0, %c0_i32_1 : i32, i32, i32
  }
  func.func @transform_2(%arg0: i32) -> (i32, i32, i32) {
    %c0_i32 = arith.constant 0 : i32
    %c0_i32_0 = arith.constant 0 : i32
    %c0_i32_1 = arith.constant 0 : i32
    %c0_i32_2 = arith.constant 0 : i32
    return %c0_i32, %c0_i32_0, %c0_i32_1 : i32, i32, i32
  }
  func.func @transform_3(%arg0: i32) -> (i32, i32) {
    %c0_i32 = arith.constant 0 : i32
    %c0_i32_0 = arith.constant 0 : i32
    %c0_i32_1 = arith.constant 0 : i32
    return %c0_i32, %c0_i32_0 : i32, i32
  }
  func.func @transform_4(%arg0: i32) -> (i32, i32, i32) {
    %c0_i32 = arith.constant 0 : i32
    %c0_i32_0 = arith.constant 0 : i32
    %c0_i32_1 = arith.constant 0 : i32
    return %arg0, %c0_i32, %c0_i32_0 : i32, i32, i32
  }
  func.func @transform_5(%arg0: i32) -> (i32, i32, i32) {
    %c0_i32 = arith.constant 0 : i32
    %c0_i32_0 = arith.constant 0 : i32
    %c0_i32_1 = arith.constant 0 : i32
    %c0_i32_2 = arith.constant 0 : i32
    return %c0_i32, %c0_i32_0, %c0_i32_1 : i32, i32, i32
  }
}

</mosaic_0001>

<llo_original>
// kernel: lstm_network_forward.1
$region0: #{lstm_network_forward.1}
  #allocation0 [shape = 'u32[]', space=smem, size = 0x4, offset = 0x4, fixed_abs, tag = 'smem constant byte address 0x4 - core index']
  #allocation1 [shape = 'u32[144,128]{1,0:T(1,128)}', space=vmem, size = 0x12000, scoped, tag = 'internal scratch']
  %s0 = inlined_call_operand.vmem [shape: f32[1,1,32], index: 0, kind: input, shape index: {}]
  %s1 = inlined_call_operand.vmem [shape: f32[2,1,128], index: 1, kind: input, shape index: {}, may-alias: {1,5}]
  %s2 = inlined_call_operand.hbm [shape: f32[2,72,128], index: 2, kind: input, shape index: {}]
  %s3 = inlined_call_operand.hbm [shape: f32[40,128], index: 3, kind: input, shape index: {}]
  %s4 = inlined_call_operand.hbm [shape: f32[1,1,128], index: 4, kind: output, shape index: {0}]
  %s5 = inlined_call_operand.vmem [shape: f32[2,1,128], index: 5, kind: output, shape index: {1}, may-alias: {1,5}]
  %6 = xla_tuple %s4, %s5
  %s7 = sld [smem:[#allocation0]]
  $region46: #{lstm_network_forward.1} parent=0
    _
  %s9 = ssub.s32 1, %s7
  %s10 = scalar_select 0, %s9, %s7
  $region1: #{lstm_network_forward.1} parent=0
    #allocation2 [shape = 'u8[73728]{0}', space=vmem, size = 0x12000, scoped, tag = 'input window, operand 2, single buffered']
    #allocation3 [shape = 's32[1]{0}', space=sflag, size = 0x4, scoped, tag = 'scoped memory for lstm_network_forward.1']
    #allocation4 [shape = 's32[1]{0}', space=sflag, size = 0x4, scoped, tag = 'scoped memory for lstm_network_forward.1']
    #allocation5 [shape = 'u8[20480]{0}', space=vmem, size = 0x5000, scoped, tag = 'input window, operand 3, single buffered']
    #allocation6 [shape = 's32[1]{0}', space=sflag, size = 0x4, scoped, tag = 'scoped memory for lstm_network_forward.1']
    #allocation7 [shape = 'u8[512]{0}', space=vmem, size = 0x400, scoped, tag = 'output window, operand 0, single buffered']
    %11 = vsyncpa [#allocation3], 0
    %12 = vsyncpa [#allocation6], 0
    %13 = vsyncpa [#allocation4], 0
    // Predicated region
    $region2: #{lstm_network_forward.1} parent=1 // pred_check
      _
    $region3: #{lstm_network_forward.1} parent=1 // pred_check_branch
      %15 = sbr.rel (0) target = $region5
    $region4: #{lstm_network_forward.1} parent=1 // pred_region
      _
    $region5: #{lstm_network_forward.1} parent=1 // pred_fallthru
      _
    // Predicated region
    $region6: #{lstm_network_forward.1} parent=1 // pred_check
      _
    $region7: #{lstm_network_forward.1} parent=1 // pred_check_branch
      %17 = sbr.rel (0) target = $region9
    $region8: #{lstm_network_forward.1} parent=1 // pred_region
      _
    $region9: #{lstm_network_forward.1} parent=1 // pred_fallthru
      _
    // Predicated region
    $region10: #{lstm_network_forward.1} parent=1 // pred_check
      _
    $region11: #{lstm_network_forward.1} parent=1 // pred_check_branch
      %19 = sbr.rel (0) target = $region13
    $region12: #{lstm_network_forward.1} parent=1 // pred_region
      %s21 = ssub.s32 2304, 2304
      %22 = vsyncadd [#allocation3], %s21
      %s23 = sshll.u32 [#allocation2], 4
      %s24 = int_to_ptr.vmem [resolvable:$true] %s23
      %29 = dma.hbm_to_vmem [thread:$0]  %s2, 2304, %s24, [#allocation3], 128, 128, 8
    $region13: #{lstm_network_forward.1} parent=1 // pred_fallthru
      _
    // Predicated region
    $region14: #{lstm_network_forward.1} parent=1 // pred_check
      _
    $region15: #{lstm_network_forward.1} parent=1 // pred_check_branch
      %31 = sbr.rel (0) target = $region17
    $region16: #{lstm_network_forward.1} parent=1 // pred_region
      %s33 = ssub.s32 640, 640
      %34 = vsyncadd [#allocation6], %s33
      %s35 = sshll.u32 [#allocation5], 4
      %s36 = int_to_ptr.vmem [resolvable:$true] %s35
      %41 = dma.hbm_to_vmem [thread:$0]  %s3, 640, %s36, [#allocation6], 128, 128, 8
    $region17: #{lstm_network_forward.1} parent=1 // pred_fallthru
      _
    // Predicated region
    $region18: #{lstm_network_forward.1} parent=1 // pred_check
      _
    $region19: #{lstm_network_forward.1} parent=1 // pred_check_branch
      %43 = sbr.rel (0) target = $region21
    $region20: #{lstm_network_forward.1} parent=1 // pred_region
      %44 = dma.done [#allocation3], 2304
    $region21: #{lstm_network_forward.1} parent=1 // pred_fallthru
      _
    // Predicated region
    $region22: #{lstm_network_forward.1} parent=1 // pred_check
      _
    $region23: #{lstm_network_forward.1} parent=1 // pred_check_branch
      %46 = sbr.rel (0) target = $region25
    $region24: #{lstm_network_forward.1} parent=1 // pred_region
      %47 = dma.done [#allocation6], 640
    $region25: #{lstm_network_forward.1} parent=1 // pred_fallthru
      _
    %p48 = scmp.eq.s32.totalorder 0, 0
    // Predicated region
    $region26: #{lstm_network_forward.1} parent=1 // pred_check
      %p49 = pneg %p48
    $region27: #{lstm_network_forward.1} parent=1 // pred_check_branch
      %51 = sbr.rel (%p49) target = $region29
    $region28: #{lstm_network_forward.1} parent=1 // pred_region
      %v52 = vld [vmem:[%s1] sm:$0x1]
      %v53 = vld [vmem:[%s1 + $0x1] sm:$0x1]
      %54 = vst [vmem:[%s5] sm:$0x1] %v52
      %55 = vst [vmem:[%s5 + $0x1] sm:$0x1] %v53
    $region29: #{lstm_network_forward.1} parent=1 // pred_fallthru
      _
    %v56 = vld [vmem:[%s0] sm:$0x1]
    %v57 = vld [vmem:[#allocation2] sm:$0xff]
    %v58 = vld [vmem:[#allocation2 + $0x8] sm:$0xff]
    %v59 = vld [vmem:[#allocation2 + $0x10] sm:$0xff]
    %v60 = vld [vmem:[#allocation2 + $0x18] sm:$0xff]
    %v61 = vld [vmem:[#allocation2 + $0x20] sm:$0xff]
    %v62 = vld [vmem:[#allocation2 + $0x28] sm:$0xff]
    %v63 = vld [vmem:[#allocation2 + $0x30] sm:$0xff]
    %v64 = vld [vmem:[#allocation2 + $0x38] sm:$0xff]
    %v65 = vld [vmem:[#allocation2 + $0x40] sm:$0xff]
    %v66 = vld [vmem:[%s5] sm:$0x1]
    %v68 = vlaneseq
    %v69 = vshrl.u32 %v68, 7
    %v70 = vsub.s32 0, %v69
    %v71 = vrot.slane %v66, %v70
    %72 = vrot.lane.b32.xlu0 %v71, 32
    %v73 = vpop.permute.xlu0 %72
    %vm75 = vcmask 261120
    %v76 = vsel %vm75, %v56, %v73
    %vm77 = vcmask 523264
    %v79 = vsel %vm77, %v76, 0
    %81 = vmatprep.subr.mxu0 0.0
    %v82 = vand.u32 %v57, 4294901760
    %83 = vmatpush1.msra.mxu0 %v82
    %84 = vmatprep.subr.mxu0 0.0
    %v85 = vand.u32 %v58, 4294901760
    %86 = vmatpush1.msra.mxu0 %v85
    %87 = vmatprep.subr.mxu0 0.0
    %v88 = vand.u32 %v59, 4294901760
    %89 = vmatpush1.msra.mxu0 %v88
    %90 = vmatprep.subr.mxu0 0.0
    %v91 = vand.u32 %v60, 4294901760
    %92 = vmatpush1.msra.mxu0 %v91
    %93 = vmatprep.subr.mxu0 0.0
    %v94 = vand.u32 %v61, 4294901760
    %95 = vmatpush1.msra.mxu0 %v94
    %96 = vmatprep.subr.mxu0 0.0
    %v97 = vand.u32 %v62, 4294901760
    %98 = vmatpush1.msra.mxu0 %v97
    %99 = vmatprep.subr.mxu0 0.0
    %v100 = vand.u32 %v63, 4294901760
    %101 = vmatpush1.msra.mxu0 %v100
    %102 = vmatprep.subr.mxu0 0.0
    %v103 = vand.u32 %v64, 4294901760
    %104 = vmatpush1.msra.mxu0 %v103
    %105 = vmatprep.subr.mxu0 0.0
    %106 = vmatpush1.msra.mxu0 0.0
    %107 = vmatprep.subr.mxu0 0.0
    %108 = vmatpush1.msra.mxu0 0.0
    %109 = vmatprep.subr.mxu0 0.0
    %110 = vmatpush1.msra.mxu0 0.0
    %111 = vmatprep.subr.mxu0 0.0
    %112 = vmatpush1.msra.mxu0 0.0
    %113 = vmatprep.subr.mxu0 0.0
    %114 = vmatpush1.msra.mxu0 0.0
    %115 = vmatprep.subr.mxu0 0.0
    %116 = vmatpush1.msra.mxu0 0.0
    %117 = vmatprep.subr.mxu0 0.0
    %118 = vmatpush1.msra.mxu0 0.0
    %119 = vmatprep.subr.mxu0 0.0
    %120 = vmatpush1.msra.mxu0 0.0
    %121 = vmatprep.subr.mxu0 0.0
    %122 = vmatpush1.msra.mxu0 0.0
    %123 = vmatprep.subr.mxu0 0.0
    %124 = vmatpush1.msra.mxu0 0.0
    %125 = vmatprep.subr.mxu0 0.0
    %126 = vmatpush1.msra.mxu0 0.0
    %127 = vmatprep.subr.mxu0 0.0
    %128 = vmatpush1.msra.mxu0 0.0
    %129 = vmatprep.subr.mxu0 0.0
    %130 = vmatpush1.msra.mxu0 0.0
    %131 = vmatprep.subr.mxu0 0.0
    %132 = vmatpush1.msra.mxu0 0.0
    %133 = vmatprep.subr.mxu0 0.0
    %134 = vmatpush1.msra.mxu0 0.0
    %135 = vmatprep.subr.mxu0 0.0
    %136 = vmatpush1.msra.mxu0 0.0
    %137 = vmatprep.subr.mxu0 0.0
    %138 = vmatpush1.msra.mxu0 0.0
    %139 = vmatprep.subr.mxu0 0.0
    %140 = vmatpush1.msra.mxu0 0.0
    %141 = vmatprep.subr.mxu0 0.0
    %142 = vmatpush1.msra.mxu0 0.0
    %143 = vmatprep.subr.mxu0 0.0
    %144 = vmatpush1.msra.mxu0 0.0
    %145 = vmatprep.subr.mxu0 0.0
    %146 = vmatpush1.msra.mxu0 0.0
    %147 = vmatprep.subr.mxu0 0.0
    %148 = vmatpush1.msra.mxu0 0.0
    %149 = vmatprep.subr.mxu0 0.0
    %150 = vmatpush1.msra.mxu0 0.0
    %151 = vmatprep.subr.mxu0 0.0
    %152 = vmatpush1.msra.mxu0 0.0
    %153 = vmatprep.mubr.f32.mxu0 0.0
    %v154 = vand.u32 %v79, 4294901760
    %v155 = vsub.f32 %v79, %v154
    %v156 = vand.u32 %v155, 4294901760
    %v157 = vsub.f32 %v155, %v156
    %v158 = vand.u32 %v157, 4294901760
    %159 = vmatmul.mubr.f32.gmra.mrb[0].mxu0 %v158
    %v160 = vpop.f32.mrb[0].mxu0
    %v161 = vadd.f32 %v65, %v160
    %v162 = vpop.f32.mrb[0].mxu0
    %163 = vdwg.mxu0
    %164 = vmatprep.subr.mxu0 0.0
    %v165 = vand.u32 %v57, 4294901760
    %v166 = vsub.f32 %v57, %v165
    %v167 = vand.u32 %v166, 4294901760
    %v168 = vsub.f32 %v166, %v167
    %v169 = vand.u32 %v168, 4294901760
    %170 = vmatpush1.msra.mxu0 %v169
    %171 = vmatprep.subr.mxu0 0.0
    %v172 = vand.u32 %v58, 4294901760
    %v173 = vsub.f32 %v58, %v172
    %v174 = vand.u32 %v173, 4294901760
    %v175 = vsub.f32 %v173, %v174
    %v176 = vand.u32 %v175, 4294901760
    %177 = vmatpush1.msra.mxu0 %v176
    %178 = vmatprep.subr.mxu0 0.0
    %v179 = vand.u32 %v59, 4294901760
    %v180 = vsub.f32 %v59, %v179
    %v181 = vand.u32 %v180, 4294901760
    %v182 = vsub.f32 %v180, %v181
    %v183 = vand.u32 %v182, 4294901760
    %184 = vmatpush1.msra.mxu0 %v183
    %185 = vmatprep.subr.mxu0 0.0
    %v186 = vand.u32 %v60, 4294901760
    %v187 = vsub.f32 %v60, %v186
    %v188 = vand.u32 %v187, 4294901760
    %v189 = vsub.f32 %v187, %v188
    %v190 = vand.u32 %v189, 4294901760
    %191 = vmatpush1.msra.mxu0 %v190
    %192 = vmatprep.subr.mxu0 0.0
    %v193 = vand.u32 %v61, 4294901760
    %v194 = vsub.f32 %v61, %v193
    %v195 = vand.u32 %v194, 4294901760
    %v196 = vsub.f32 %v194, %v195
    %v197 = vand.u32 %v196, 4294901760
    %198 = vmatpush1.msra.mxu0 %v197
    %199 = vmatprep.subr.mxu0 0.0
    %v200 = vand.u32 %v62, 4294901760
    %v201 = vsub.f32 %v62, %v200
    %v202 = vand.u32 %v201, 4294901760
    %v203 = vsub.f32 %v201, %v202
    %v204 = vand.u32 %v203, 4294901760
    %205 = vmatpush1.msra.mxu0 %v204
    %206 = vmatprep.subr.mxu0 0.0
    %v207 = vand.u32 %v63, 4294901760
    %v208 = vsub.f32 %v63, %v207
    %v209 = vand.u32 %v208, 4294901760
    %v210 = vsub.f32 %v208, %v209
    %v211 = vand.u32 %v210, 4294901760
    %212 = vmatpush1.msra.mxu0 %v211
    %213 = vmatprep.subr.mxu0 0.0
    %v214 = vand.u32 %v64, 4294901760
    %v215 = vsub.f32 %v64, %v214
    %v216 = vand.u32 %v215, 4294901760
    %v217 = vsub.f32 %v215, %v216
    %v218 = vand.u32 %v217, 4294901760
    %219 = vmatpush1.msra.mxu0 %v218
    %220 = vmatprep.subr.mxu0 0.0
    %221 = vmatpush1.msra.mxu0 0.0
    %222 = vmatprep.subr.mxu0 0.0
    %223 = vmatpush1.msra.mxu0 0.0
    %224 = vmatprep.subr.mxu0 0.0
    %225 = vmatpush1.msra.mxu0 0.0
    %226 = vmatprep.subr.mxu0 0.0
    %227 = vmatpush1.msra.mxu0 0.0
    %228 = vmatprep.subr.mxu0 0.0
    %229 = vmatpush1.msra.mxu0 0.0
    %230 = vmatprep.subr.mxu0 0.0
    %231 = vmatpush1.msra.mxu0 0.0
    %232 = vmatprep.subr.mxu0 0.0
    %233 = vmatpush1.msra.mxu0 0.0
    %234 = vmatprep.subr.mxu0 0.0
    %235 = vmatpush1.msra.mxu0 0.0
    %236 = vmatprep.subr.mxu0 0.0
    %237 = vmatpush1.msra.mxu0 0.0
    %238 = vmatprep.subr.mxu0 0.0
    %239 = vmatpush1.msra.mxu0 0.0
    %240 = vmatprep.subr.mxu0 0.0
    %241 = vmatpush1.msra.mxu0 0.0
    %242 = vmatprep.subr.mxu0 0.0
    %243 = vmatpush1.msra.mxu0 0.0
    %244 = vmatprep.subr.mxu0 0.0
    %245 = vmatpush1.msra.mxu0 0.0
    %246 = vmatprep.subr.mxu0 0.0
    %247 = vmatpush1.msra.mxu0 0.0
    %248 = vmatprep.subr.mxu0 0.0
    %249 = vmatpush1.msra.mxu0 0.0
    %250 = vmatprep.subr.mxu0 0.0
    %251 = vmatpush1.msra.mxu0 0.0
    %252 = vmatprep.subr.mxu0 0.0
    %253 = vmatpush1.msra.mxu0 0.0
    %254 = vmatprep.subr.mxu0 0.0
    %255 = vmatpush1.msra.mxu0 0.0
    %256 = vmatprep.subr.mxu0 0.0
    %257 = vmatpush1.msra.mxu0 0.0
    %258 = vmatprep.subr.mxu0 0.0
    %259 = vmatpush1.msra.mxu0 0.0
    %260 = vmatprep.subr.mxu0 0.0
    %261 = vmatpush1.msra.mxu0 0.0
    %262 = vmatprep.subr.mxu0 0.0
    %263 = vmatpush1.msra.mxu0 0.0
    %264 = vmatprep.subr.mxu0 0.0
    %265 = vmatpush1.msra.mxu0 0.0
    %266 = vmatprep.subr.mxu0 0.0
    %267 = vmatpush1.msra.mxu0 0.0
    %268 = vmatprep.mubr.f32.mxu0 0.0
    %v269 = vand.u32 %v79, 4294901760
    %270 = vmatmul.mubr.f32.gmra.mrb[0].mxu0 %v269
    %v271 = vpop.f32.mrb[0].mxu0
    %v272 = vadd.f32 %v161, %v271
    %v273 = vpop.f32.mrb[0].mxu0
    %274 = vdwg.mxu0
    %275 = vmatprep.subr.mxu0 0.0
    %v276 = vand.u32 %v57, 4294901760
    %v277 = vsub.f32 %v57, %v276
    %278 = vmatpush1.msra.mxu0 %v277
    %279 = vmatprep.subr.mxu0 0.0
    %v280 = vand.u32 %v58, 4294901760
    %v281 = vsub.f32 %v58, %v280
    %282 = vmatpush1.msra.mxu0 %v281
    %283 = vmatprep.subr.mxu0 0.0
    %v284 = vand.u32 %v59, 4294901760
    %v285 = vsub.f32 %v59, %v284
    %286 = vmatpush1.msra.mxu0 %v285
    %287 = vmatprep.subr.mxu0 0.0
    %v288 = vand.u32 %v60, 4294901760
    %v289 = vsub.f32 %v60, %v288
    %290 = vmatpush1.msra.mxu0 %v289
    %291 = vmatprep.subr.mxu0 0.0
    %v292 = vand.u32 %v61, 4294901760
    %v293 = vsub.f32 %v61, %v292
    %294 = vmatpush1.msra.mxu0 %v293
    %295 = vmatprep.subr.mxu0 0.0
    %v296 = vand.u32 %v62, 4294901760
    %v297 = vsub.f32 %v62, %v296
    %298 = vmatpush1.msra.mxu0 %v297
    %299 = vmatprep.subr.mxu0 0.0
    %v300 = vand.u32 %v63, 4294901760
    %v301 = vsub.f32 %v63, %v300
    %302 = vmatpush1.msra.mxu0 %v301
    %303 = vmatprep.subr.mxu0 0.0
    %v304 = vand.u32 %v64, 4294901760
    %v305 = vsub.f32 %v64, %v304
    %306 = vmatpush1.msra.mxu0 %v305
    %307 = vmatprep.subr.mxu0 0.0
    %308 = vmatpush1.msra.mxu0 0.0
    %309 = vmatprep.subr.mxu0 0.0
    %310 = vmatpush1.msra.mxu0 0.0
    %311 = vmatprep.subr.mxu0 0.0
    %312 = vmatpush1.msra.mxu0 0.0
    %313 = vmatprep.subr.mxu0 0.0
    %314 = vmatpush1.msra.mxu0 0.0
    %315 = vmatprep.subr.mxu0 0.0
    %316 = vmatpush1.msra.mxu0 0.0
    %317 = vmatprep.subr.mxu0 0.0
    %318 = vmatpush1.msra.mxu0 0.0
    %319 = vmatprep.subr.mxu0 0.0
    %320 = vmatpush1.msra.mxu0 0.0
    %321 = vmatprep.subr.mxu0 0.0
    %322 = vmatpush1.msra.mxu0 0.0
    %323 = vmatprep.subr.mxu0 0.0
    %324 = vmatpush1.msra.mxu0 0.0
    %325 = vmatprep.subr.mxu0 0.0
    %326 = vmatpush1.msra.mxu0 0.0
    %327 = vmatprep.subr.mxu0 0.0
    %328 = vmatpush1.msra.mxu0 0.0
    %329 = vmatprep.subr.mxu0 0.0
    %330 = vmatpush1.msra.mxu0 0.0
    %331 = vmatprep.subr.mxu0 0.0
    %332 = vmatpush1.msra.mxu0 0.0
    %333 = vmatprep.subr.mxu0 0.0
    %334 = vmatpush1.msra.mxu0 0.0
    %335 = vmatprep.subr.mxu0 0.0
    %336 = vmatpush1.msra.mxu0 0.0
    %337 = vmatprep.subr.mxu0 0.0
    %338 = vmatpush1.msra.mxu0 0.0
    %339 = vmatprep.subr.mxu0 0.0
    %340 = vmatpush1.msra.mxu0 0.0
    %341 = vmatprep.subr.mxu0 0.0
    %342 = vmatpush1.msra.mxu0 0.0
    %343 = vmatprep.subr.mxu0 0.0
    %344 = vmatpush1.msra.mxu0 0.0
    %345 = vmatprep.subr.mxu0 0.0
    %346 = vmatpush1.msra.mxu0 0.0
    %347 = vmatprep.subr.mxu0 0.0
    %348 = vmatpush1.msra.mxu0 0.0
    %349 = vmatprep.subr.mxu0 0.0
    %350 = vmatpush1.msra.mxu0 0.0
    %351 = vmatprep.subr.mxu0 0.0
    %352 = vmatpush1.msra.mxu0 0.0
    %353 = vmatprep.subr.mxu0 0.0
    %354 = vmatpush1.msra.mxu0 0.0
    %355 = vmatprep.mubr.f32.mxu0 0.0
    %v356 = vand.u32 %v79, 4294901760
    %v357 = vsub.f32 %v79, %v356
    %358 = vmatmul.mubr.f32.gmra.mrb[0].mxu0 %v357
    %v359 = vpop.f32.mrb[0].mxu0
    %v360 = vadd.f32 %v272, %v359
    %v361 = vpop.f32.mrb[0].mxu0
    %362 = vdwg.mxu0
    %363 = vmatprep.subr.mxu0 0.0
    %v364 = vand.u32 %v57, 4294901760
    %365 = vmatpush1.msra.mxu0 %v364
    %366 = vmatprep.subr.mxu0 0.0
    %v367 = vand.u32 %v58, 4294901760
    %368 = vmatpush1.msra.mxu0 %v367
    %369 = vmatprep.subr.mxu0 0.0
    %v370 = vand.u32 %v59, 4294901760
    %371 = vmatpush1.msra.mxu0 %v370
    %372 = vmatprep.subr.mxu0 0.0
    %v373 = vand.u32 %v60, 4294901760
    %374 = vmatpush1.msra.mxu0 %v373
    %375 = vmatprep.subr.mxu0 0.0
    %v376 = vand.u32 %v61, 4294901760
    %377 = vmatpush1.msra.mxu0 %v376
    %378 = vmatprep.subr.mxu0 0.0
    %v379 = vand.u32 %v62, 4294901760
    %380 = vmatpush1.msra.mxu0 %v379
    %381 = vmatprep.subr.mxu0 0.0
    %v382 = vand.u32 %v63, 4294901760
    %383 = vmatpush1.msra.mxu0 %v382
    %384 = vmatprep.subr.mxu0 0.0
    %v385 = vand.u32 %v64, 4294901760
    %386 = vmatpush1.msra.mxu0 %v385
    %387 = vmatprep.subr.mxu0 0.0
    %388 = vmatpush1.msra.mxu0 0.0
    %389 = vmatprep.subr.mxu0 0.0
    %390 = vmatpush1.msra.mxu0 0.0
    %391 = vmatprep.subr.mxu0 0.0
    %392 = vmatpush1.msra.mxu0 0.0
    %393 = vmatprep.subr.mxu0 0.0
    %394 = vmatpush1.msra.mxu0 0.0
    %395 = vmatprep.subr.mxu0 0.0
    %396 = vmatpush1.msra.mxu0 0.0
    %397 = vmatprep.subr.mxu0 0.0
    %398 = vmatpush1.msra.mxu0 0.0
    %399 = vmatprep.subr.mxu0 0.0
    %400 = vmatpush1.msra.mxu0 0.0
    %401 = vmatprep.subr.mxu0 0.0
    %402 = vmatpush1.msra.mxu0 0.0
    %403 = vmatprep.subr.mxu0 0.0
    %404 = vmatpush1.msra.mxu0 0.0
    %405 = vmatprep.subr.mxu0 0.0
    %406 = vmatpush1.msra.mxu0 0.0
    %407 = vmatprep.subr.mxu0 0.0
    %408 = vmatpush1.msra.mxu0 0.0
    %409 = vmatprep.subr.mxu0 0.0
    %410 = vmatpush1.msra.mxu0 0.0
    %411 = vmatprep.subr.mxu0 0.0
    %412 = vmatpush1.msra.mxu0 0.0
    %413 = vmatprep.subr.mxu0 0.0
    %414 = vmatpush1.msra.mxu0 0.0
    %415 = vmatprep.subr.mxu0 0.0
    %416 = vmatpush1.msra.mxu0 0.0
    %417 = vmatprep.subr.mxu0 0.0
    %418 = vmatpush1.msra.mxu0 0.0
    %419 = vmatprep.subr.mxu0 0.0
    %420 = vmatpush1.msra.mxu0 0.0
    %421 = vmatprep.subr.mxu0 0.0
    %422 = vmatpush1.msra.mxu0 0.0
    %423 = vmatprep.subr.mxu0 0.0
    %424 = vmatpush1.msra.mxu0 0.0
    %425 = vmatprep.subr.mxu0 0.0
    %426 = vmatpush1.msra.mxu0 0.0
    %427 = vmatprep.subr.mxu0 0.0
    %428 = vmatpush1.msra.mxu0 0.0
    %429 = vmatprep.subr.mxu0 0.0
    %430 = vmatpush1.msra.mxu0 0.0
    %431 = vmatprep.subr.mxu0 0.0
    %432 = vmatpush1.msra.mxu0 0.0
    %433 = vmatprep.subr.mxu0 0.0
    %434 = vmatpush1.msra.mxu0 0.0
    %435 = vmatprep.mubr.f32.mxu0 0.0
    %v436 = vand.u32 %v79, 4294901760
    %v437 = vsub.f32 %v79, %v436
    %v438 = vand.u32 %v437, 4294901760
    %439 = vmatmul.mubr.f32.gmra.mrb[0].mxu0 %v438
    %v440 = vpop.f32.mrb[0].mxu0
    %v441 = vadd.f32 %v360, %v440
    %v442 = vpop.f32.mrb[0].mxu0
    %443 = vdwg.mxu0
    %444 = vmatprep.subr.mxu0 0.0
    %v445 = vand.u32 %v57, 4294901760
    %v446 = vsub.f32 %v57, %v445
    %v447 = vand.u32 %v446, 4294901760
    %448 = vmatpush1.msra.mxu0 %v447
    %449 = vmatprep.subr.mxu0 0.0
    %v450 = vand.u32 %v58, 4294901760
    %v451 = vsub.f32 %v58, %v450
    %v452 = vand.u32 %v451, 4294901760
    %453 = vmatpush1.msra.mxu0 %v452
    %454 = vmatprep.subr.mxu0 0.0
    %v455 = vand.u32 %v59, 4294901760
    %v456 = vsub.f32 %v59, %v455
    %v457 = vand.u32 %v456, 4294901760
    %458 = vmatpush1.msra.mxu0 %v457
    %459 = vmatprep.subr.mxu0 0.0
    %v460 = vand.u32 %v60, 4294901760
    %v461 = vsub.f32 %v60, %v460
    %v462 = vand.u32 %v461, 4294901760
    %463 = vmatpush1.msra.mxu0 %v462
    %464 = vmatprep.subr.mxu0 0.0
    %v465 = vand.u32 %v61, 4294901760
    %v466 = vsub.f32 %v61, %v465
    %v467 = vand.u32 %v466, 4294901760
    %468 = vmatpush1.msra.mxu0 %v467
    %469 = vmatprep.subr.mxu0 0.0
    %v470 = vand.u32 %v62, 4294901760
    %v471 = vsub.f32 %v62, %v470
    %v472 = vand.u32 %v471, 4294901760
    %473 = vmatpush1.msra.mxu0 %v472
    %474 = vmatprep.subr.mxu0 0.0
    %v475 = vand.u32 %v63, 4294901760
    %v476 = vsub.f32 %v63, %v475
    %v477 = vand.u32 %v476, 4294901760
    %478 = vmatpush1.msra.mxu0 %v477
    %479 = vmatprep.subr.mxu0 0.0
    %v480 = vand.u32 %v64, 4294901760
    %v481 = vsub.f32 %v64, %v480
    %v482 = vand.u32 %v481, 4294901760
    %483 = vmatpush1.msra.mxu0 %v482
    %484 = vmatprep.subr.mxu0 0.0
    %485 = vmatpush1.msra.mxu0 0.0
    %486 = vmatprep.subr.mxu0 0.0
    %487 = vmatpush1.msra.mxu0 0.0
    %488 = vmatprep.subr.mxu0 0.0
    %489 = vmatpush1.msra.mxu0 0.0
    %490 = vmatprep.subr.mxu0 0.0
    %491 = vmatpush1.msra.mxu0 0.0
    %492 = vmatprep.subr.mxu0 0.0
    %493 = vmatpush1.msra.mxu0 0.0
    %494 = vmatprep.subr.mxu0 0.0
    %495 = vmatpush1.msra.mxu0 0.0
    %496 = vmatprep.subr.mxu0 0.0
    %497 = vmatpush1.msra.mxu0 0.0
    %498 = vmatprep.subr.mxu0 0.0
    %499 = vmatpush1.msra.mxu0 0.0
    %500 = vmatprep.subr.mxu0 0.0
    %501 = vmatpush1.msra.mxu0 0.0
    %502 = vmatprep.subr.mxu0 0.0
    %503 = vmatpush1.msra.mxu0 0.0
    %504 = vmatprep.subr.mxu0 0.0
    %505 = vmatpush1.msra.mxu0 0.0
    %506 = vmatprep.subr.mxu0 0.0
    %507 = vmatpush1.msra.mxu0 0.0
    %508 = vmatprep.subr.mxu0 0.0
    %509 = vmatpush1.msra.mxu0 0.0
    %510 = vmatprep.subr.mxu0 0.0
    %511 = vmatpush1.msra.mxu0 0.0
    %512 = vmatprep.subr.mxu0 0.0
    %513 = vmatpush1.msra.mxu0 0.0
    %514 = vmatprep.subr.mxu0 0.0
    %515 = vmatpush1.msra.mxu0 0.0
    %516 = vmatprep.subr.mxu0 0.0
    %517 = vmatpush1.msra.mxu0 0.0
    %518 = vmatprep.subr.mxu0 0.0
    %519 = vmatpush1.msra.mxu0 0.0
    %520 = vmatprep.subr.mxu0 0.0
    %521 = vmatpush1.msra.mxu0 0.0
    %522 = vmatprep.subr.mxu0 0.0
    %523 = vmatpush1.msra.mxu0 0.0
    %524 = vmatprep.subr.mxu0 0.0
    %525 = vmatpush1.msra.mxu0 0.0
    %526 = vmatprep.subr.mxu0 0.0
    %527 = vmatpush1.msra.mxu0 0.0
    %528 = vmatprep.subr.mxu0 0.0
    %529 = vmatpush1.msra.mxu0 0.0
    %530 = vmatprep.subr.mxu0 0.0
    %531 = vmatpush1.msra.mxu0 0.0
    %532 = vmatprep.mubr.f32.mxu0 0.0
    %v533 = vand.u32 %v79, 4294901760
    %534 = vmatmul.mubr.f32.gmra.mrb[0].mxu0 %v533
    %v535 = vpop.f32.mrb[0].mxu0
    %v536 = vadd.f32 %v441, %v535
    %v537 = vpop.f32.mrb[0].mxu0
    %538 = vdwg.mxu0
    %539 = vmatprep.subr.mxu0 0.0
    %v540 = vand.u32 %v57, 4294901760
    %541 = vmatpush1.msra.mxu0 %v540
    %542 = vmatprep.subr.mxu0 0.0
    %v543 = vand.u32 %v58, 4294901760
    %544 = vmatpush1.msra.mxu0 %v543
    %545 = vmatprep.subr.mxu0 0.0
    %v546 = vand.u32 %v59, 4294901760
    %547 = vmatpush1.msra.mxu0 %v546
    %548 = vmatprep.subr.mxu0 0.0
    %v549 = vand.u32 %v60, 4294901760
    %550 = vmatpush1.msra.mxu0 %v549
    %551 = vmatprep.subr.mxu0 0.0
    %v552 = vand.u32 %v61, 4294901760
    %553 = vmatpush1.msra.mxu0 %v552
    %554 = vmatprep.subr.mxu0 0.0
    %v555 = vand.u32 %v62, 4294901760
    %556 = vmatpush1.msra.mxu0 %v555
    %557 = vmatprep.subr.mxu0 0.0
    %v558 = vand.u32 %v63, 4294901760
    %559 = vmatpush1.msra.mxu0 %v558
    %560 = vmatprep.subr.mxu0 0.0
    %v561 = vand.u32 %v64, 4294901760
    %562 = vmatpush1.msra.mxu0 %v561
    %563 = vmatprep.subr.mxu0 0.0
    %564 = vmatpush1.msra.mxu0 0.0
    %565 = vmatprep.subr.mxu0 0.0
    %566 = vmatpush1.msra.mxu0 0.0
    %567 = vmatprep.subr.mxu0 0.0
    %568 = vmatpush1.msra.mxu0 0.0
    %569 = vmatprep.subr.mxu0 0.0
    %570 = vmatpush1.msra.mxu0 0.0
    %571 = vmatprep.subr.mxu0 0.0
    %572 = vmatpush1.msra.mxu0 0.0
    %573 = vmatprep.subr.mxu0 0.0
    %574 = vmatpush1.msra.mxu0 0.0
    %575 = vmatprep.subr.mxu0 0.0
    %576 = vmatpush1.msra.mxu0 0.0
    %577 = vmatprep.subr.mxu0 0.0
    %578 = vmatpush1.msra.mxu0 0.0
    %579 = vmatprep.subr.mxu0 0.0
    %580 = vmatpush1.msra.mxu0 0.0
    %581 = vmatprep.subr.mxu0 0.0
    %582 = vmatpush1.msra.mxu0 0.0
    %583 = vmatprep.subr.mxu0 0.0
    %584 = vmatpush1.msra.mxu0 0.0
    %585 = vmatprep.subr.mxu0 0.0
    %586 = vmatpush1.msra.mxu0 0.0
    %587 = vmatprep.subr.mxu0 0.0
    %588 = vmatpush1.msra.mxu0 0.0
    %589 = vmatprep.subr.mxu0 0.0
    %590 = vmatpush1.msra.mxu0 0.0
    %591 = vmatprep.subr.mxu0 0.0
    %592 = vmatpush1.msra.mxu0 0.0
    %593 = vmatprep.subr.mxu0 0.0
    %594 = vmatpush1.msra.mxu0 0.0
    %595 = vmatprep.subr.mxu0 0.0
    %596 = vmatpush1.msra.mxu0 0.0
    %597 = vmatprep.subr.mxu0 0.0
    %598 = vmatpush1.msra.mxu0 0.0
    %599 = vmatprep.subr.mxu0 0.0
    %600 = vmatpush1.msra.mxu0 0.0
    %601 = vmatprep.subr.mxu0 0.0
    %602 = vmatpush1.msra.mxu0 0.0
    %603 = vmatprep.subr.mxu0 0.0
    %604 = vmatpush1.msra.mxu0 0.0
    %605 = vmatprep.subr.mxu0 0.0
    %606 = vmatpush1.msra.mxu0 0.0
    %607 = vmatprep.subr.mxu0 0.0
    %608 = vmatpush1.msra.mxu0 0.0
    %609 = vmatprep.subr.mxu0 0.0
    %610 = vmatpush1.msra.mxu0 0.0
    %611 = vmatprep.mubr.f32.mxu0 0.0
    %v612 = vand.u32 %v79, 4294901760
    %613 = vmatmul.mubr.f32.gmra.mrb[0].mxu0 %v612
    %v614 = vpop.f32.mrb[0].mxu0
    %v615 = vadd.f32 %v536, %v614
    %v616 = vpop.f32.mrb[0].mxu0
    %617 = vdwg.mxu0
    %v618 = vxor.u32 %v615, 2147483648
    %v619 = vmul.f32 %v618, 1.442695
    %v620 = vpow.pop %v619
    %v621 = vadd.f32 %v620, 1.0
    %v622 = vrcp.pop %v621
    %v623 = vmul.f32 1.0, %v622
    %v624 = vtanh.pop %v615
    %v625 = vmul.f32 %v623, %v66
    %627 = vrot.lane.b32.xlu0 %v624, 64
    %v628 = vpop.permute.xlu0 %627
    %v630 = vmul.f32 %v623, %v628
    %632 = vrot.lane.b32.xlu0 %v630, 32
    %v633 = vpop.permute.xlu0 %632
    %v635 = vadd.f32 %v625, %v633
    %v636 = vtanh.pop %v635
    %638 = vrot.lane.b32.xlu0 %v636, 64
    %v639 = vpop.permute.xlu0 %638
    %v641 = vmul.f32 %v623, %v639
    %643 = vrot.lane.b32.xlu0 %v641, 32
    %v644 = vpop.permute.xlu0 %643
    %v646 = vsel %vm75, %v644, %v635
    %v647 = vsel %vm77, %v646, 0.0
    %648 = vst [vmem:[%s5] sm:$0x1] %v647
    %s649 = scalar_lea.vmem [#allocation2], 72
    %v650 = vld [vmem:[%s649] sm:$0xff]
    %v651 = vld [vmem:[%s649 + $0x8] sm:$0xff]
    %v652 = vld [vmem:[%s649 + $0x10] sm:$0xff]
    %v653 = vld [vmem:[%s649 + $0x18] sm:$0xff]
    %v654 = vld [vmem:[%s649 + $0x20] sm:$0xff]
    %v655 = vld [vmem:[%s649 + $0x28] sm:$0xff]
    %v656 = vld [vmem:[%s649 + $0x30] sm:$0xff]
    %v657 = vld [vmem:[%s649 + $0x38] sm:$0xff]
    %v658 = vld [vmem:[%s649 + $0x40] sm:$0xff]
    %s659 = scalar_lea.vmem %s5, 1
    %v660 = vld [vmem:[%s659] sm:$0x1]
    %v662 = vlaneseq
    %v663 = vshrl.u32 %v662, 7
    %v664 = vsub.s32 0, %v663
    %v665 = vrot.slane %v660, %v664
    %666 = vrot.lane.b32.xlu0 %v665, 32
    %v667 = vpop.permute.xlu0 %666
    %v669 = vsel %vm75, %v644, %v667
    %v671 = vsel %vm77, %v669, 0
    %673 = vmatprep.subr.mxu0 0.0
    %v674 = vand.u32 %v650, 4294901760
    %675 = vmatpush1.msra.mxu0 %v674
    %676 = vmatprep.subr.mxu0 0.0
    %v677 = vand.u32 %v651, 4294901760
    %678 = vmatpush1.msra.mxu0 %v677
    %679 = vmatprep.subr.mxu0 0.0
    %v680 = vand.u32 %v652, 4294901760
    %681 = vmatpush1.msra.mxu0 %v680
    %682 = vmatprep.subr.mxu0 0.0
    %v683 = vand.u32 %v653, 4294901760
    %684 = vmatpush1.msra.mxu0 %v683
    %685 = vmatprep.subr.mxu0 0.0
    %v686 = vand.u32 %v654, 4294901760
    %687 = vmatpush1.msra.mxu0 %v686
    %688 = vmatprep.subr.mxu0 0.0
    %v689 = vand.u32 %v655, 4294901760
    %690 = vmatpush1.msra.mxu0 %v689
    %691 = vmatprep.subr.mxu0 0.0
    %v692 = vand.u32 %v656, 4294901760
    %693 = vmatpush1.msra.mxu0 %v692
    %694 = vmatprep.subr.mxu0 0.0
    %v695 = vand.u32 %v657, 4294901760
    %696 = vmatpush1.msra.mxu0 %v695
    %697 = vmatprep.subr.mxu0 0.0
    %698 = vmatpush1.msra.mxu0 0.0
    %699 = vmatprep.subr.mxu0 0.0
    %700 = vmatpush1.msra.mxu0 0.0
    %701 = vmatprep.subr.mxu0 0.0
    %702 = vmatpush1.msra.mxu0 0.0
    %703 = vmatprep.subr.mxu0 0.0
    %704 = vmatpush1.msra.mxu0 0.0
    %705 = vmatprep.subr.mxu0 0.0
    %706 = vmatpush1.msra.mxu0 0.0
    %707 = vmatprep.subr.mxu0 0.0
    %708 = vmatpush1.msra.mxu0 0.0
    %709 = vmatprep.subr.mxu0 0.0
    %710 = vmatpush1.msra.mxu0 0.0
    %711 = vmatprep.subr.mxu0 0.0
    %712 = vmatpush1.msra.mxu0 0.0
    %713 = vmatprep.subr.mxu0 0.0
    %714 = vmatpush1.msra.mxu0 0.0
    %715 = vmatprep.subr.mxu0 0.0
    %716 = vmatpush1.msra.mxu0 0.0
    %717 = vmatprep.subr.mxu0 0.0
    %718 = vmatpush1.msra.mxu0 0.0
    %719 = vmatprep.subr.mxu0 0.0
    %720 = vmatpush1.msra.mxu0 0.0
    %721 = vmatprep.subr.mxu0 0.0
    %722 = vmatpush1.msra.mxu0 0.0
    %723 = vmatprep.subr.mxu0 0.0
    %724 = vmatpush1.msra.mxu0 0.0
    %725 = vmatprep.subr.mxu0 0.0
    %726 = vmatpush1.msra.mxu0 0.0
    %727 = vmatprep.subr.mxu0 0.0
    %728 = vmatpush1.msra.mxu0 0.0
    %729 = vmatprep.subr.mxu0 0.0
    %730 = vmatpush1.msra.mxu0 0.0
    %731 = vmatprep.subr.mxu0 0.0
    %732 = vmatpush1.msra.mxu0 0.0
    %733 = vmatprep.subr.mxu0 0.0
    %734 = vmatpush1.msra.mxu0 0.0
    %735 = vmatprep.subr.mxu0 0.0
    %736 = vmatpush1.msra.mxu0 0.0
    %737 = vmatprep.subr.mxu0 0.0
    %738 = vmatpush1.msra.mxu0 0.0
    %739 = vmatprep.subr.mxu0 0.0
    %740 = vmatpush1.msra.mxu0 0.0
    %741 = vmatprep.subr.mxu0 0.0
    %742 = vmatpush1.msra.mxu0 0.0
    %743 = vmatprep.subr.mxu0 0.0
    %744 = vmatpush1.msra.mxu0 0.0
    %745 = vmatprep.mubr.f32.mxu0 0.0
    %v746 = vand.u32 %v671, 4294901760
    %v747 = vsub.f32 %v671, %v746
    %v748 = vand.u32 %v747, 4294901760
    %v749 = vsub.f32 %v747, %v748
    %v750 = vand.u32 %v749, 4294901760
    %751 = vmatmul.mubr.f32.gmra.mrb[0].mxu0 %v750
    %v752 = vpop.f32.mrb[0].mxu0
    %v753 = vadd.f32 %v658, %v752
    %v754 = vpop.f32.mrb[0].mxu0
    %755 = vdwg.mxu0
    %756 = vmatprep.subr.mxu0 0.0
    %v757 = vand.u32 %v650, 4294901760
    %v758 = vsub.f32 %v650, %v757
    %v759 = vand.u32 %v758, 4294901760
    %v760 = vsub.f32 %v758, %v759
    %v761 = vand.u32 %v760, 4294901760
    %762 = vmatpush1.msra.mxu0 %v761
    %763 = vmatprep.subr.mxu0 0.0
    %v764 = vand.u32 %v651, 4294901760
    %v765 = vsub.f32 %v651, %v764
    %v766 = vand.u32 %v765, 4294901760
    %v767 = vsub.f32 %v765, %v766
    %v768 = vand.u32 %v767, 4294901760
    %769 = vmatpush1.msra.mxu0 %v768
    %770 = vmatprep.subr.mxu0 0.0
    %v771 = vand.u32 %v652, 4294901760
    %v772 = vsub.f32 %v652, %v771
    %v773 = vand.u32 %v772, 4294901760
    %v774 = vsub.f32 %v772, %v773
    %v775 = vand.u32 %v774, 4294901760
    %776 = vmatpush1.msra.mxu0 %v775
    %777 = vmatprep.subr.mxu0 0.0
    %v778 = vand.u32 %v653, 4294901760
    %v779 = vsub.f32 %v653, %v778
    %v780 = vand.u32 %v779, 4294901760
    %v781 = vsub.f32 %v779, %v780
    %v782 = vand.u32 %v781, 4294901760
    %783 = vmatpush1.msra.mxu0 %v782
    %784 = vmatprep.subr.mxu0 0.0
    %v785 = vand.u32 %v654, 4294901760
    %v786 = vsub.f32 %v654, %v785
    %v787 = vand.u32 %v786, 4294901760
    %v788 = vsub.f32 %v786, %v787
    %v789 = vand.u32 %v788, 4294901760
    %790 = vmatpush1.msra.mxu0 %v789
    %791 = vmatprep.subr.mxu0 0.0
    %v792 = vand.u32 %v655, 4294901760
    %v793 = vsub.f32 %v655, %v792
    %v794 = vand.u32 %v793, 4294901760
    %v795 = vsub.f32 %v793, %v794
    %v796 = vand.u32 %v795, 4294901760
    %797 = vmatpush1.msra.mxu0 %v796
    %798 = vmatprep.subr.mxu0 0.0
    %v799 = vand.u32 %v656, 4294901760
    %v800 = vsub.f32 %v656, %v799
    %v801 = vand.u32 %v800, 4294901760
    %v802 = vsub.f32 %v800, %v801
    %v803 = vand.u32 %v802, 4294901760
    %804 = vmatpush1.msra.mxu0 %v803
    %805 = vmatprep.subr.mxu0 0.0
    %v806 = vand.u32 %v657, 4294901760
    %v807 = vsub.f32 %v657, %v806
    %v808 = vand.u32 %v807, 4294901760
    %v809 = vsub.f32 %v807, %v808
    %v810 = vand.u32 %v809, 4294901760
    %811 = vmatpush1.msra.mxu0 %v810
    %812 = vmatprep.subr.mxu0 0.0
    %813 = vmatpush1.msra.mxu0 0.0
    %814 = vmatprep.subr.mxu0 0.0
    %815 = vmatpush1.msra.mxu0 0.0
    %816 = vmatprep.subr.mxu0 0.0
    %817 = vmatpush1.msra.mxu0 0.0
    %818 = vmatprep.subr.mxu0 0.0
    %819 = vmatpush1.msra.mxu0 0.0
    %820 = vmatprep.subr.mxu0 0.0
    %821 = vmatpush1.msra.mxu0 0.0
    %822 = vmatprep.subr.mxu0 0.0
    %823 = vmatpush1.msra.mxu0 0.0
    %824 = vmatprep.subr.mxu0 0.0
    %825 = vmatpush1.msra.mxu0 0.0
    %826 = vmatprep.subr.mxu0 0.0
    %827 = vmatpush1.msra.mxu0 0.0
    %828 = vmatprep.subr.mxu0 0.0
    %829 = vmatpush1.msra.mxu0 0.0
    %830 = vmatprep.subr.mxu0 0.0
    %831 = vmatpush1.msra.mxu0 0.0
    %832 = vmatprep.subr.mxu0 0.0
    %833 = vmatpush1.msra.mxu0 0.0
    %834 = vmatprep.subr.mxu0 0.0
    %835 = vmatpush1.msra.mxu0 0.0
    %836 = vmatprep.subr.mxu0 0.0
    %837 = vmatpush1.msra.mxu0 0.0
    %838 = vmatprep.subr.mxu0 0.0
    %839 = vmatpush1.msra.mxu0 0.0
    %840 = vmatprep.subr.mxu0 0.0
    %841 = vmatpush1.msra.mxu0 0.0
    %842 = vmatprep.subr.mxu0 0.0
    %843 = vmatpush1.msra.mxu0 0.0
    %844 = vmatprep.subr.mxu0 0.0
    %845 = vmatpush1.msra.mxu0 0.0
    %846 = vmatprep.subr.mxu0 0.0
    %847 = vmatpush1.msra.mxu0 0.0
    %848 = vmatprep.subr.mxu0 0.0
    %849 = vmatpush1.msra.mxu0 0.0
    %850 = vmatprep.subr.mxu0 0.0
    %851 = vmatpush1.msra.mxu0 0.0
    %852 = vmatprep.subr.mxu0 0.0
    %853 = vmatpush1.msra.mxu0 0.0
    %854 = vmatprep.subr.mxu0 0.0
    %855 = vmatpush1.msra.mxu0 0.0
    %856 = vmatprep.subr.mxu0 0.0
    %857 = vmatpush1.msra.mxu0 0.0
    %858 = vmatprep.subr.mxu0 0.0
    %859 = vmatpush1.msra.mxu0 0.0
    %860 = vmatprep.mubr.f32.mxu0 0.0
    %v861 = vand.u32 %v671, 4294901760
    %862 = vmatmul.mubr.f32.gmra.mrb[0].mxu0 %v861
    %v863 = vpop.f32.mrb[0].mxu0
    %v864 = vadd.f32 %v753, %v863
    %v865 = vpop.f32.mrb[0].mxu0
    %866 = vdwg.mxu0
    %867 = vmatprep.subr.mxu0 0.0
    %v868 = vand.u32 %v650, 4294901760
    %v869 = vsub.f32 %v650, %v868
    %870 = vmatpush1.msra.mxu0 %v869
    %871 = vmatprep.subr.mxu0 0.0
    %v872 = vand.u32 %v651, 4294901760
    %v873 = vsub.f32 %v651, %v872
    %874 = vmatpush1.msra.mxu0 %v873
    %875 = vmatprep.subr.mxu0 0.0
    %v876 = vand.u32 %v652, 4294901760
    %v877 = vsub.f32 %v652, %v876
    %878 = vmatpush1.msra.mxu0 %v877
    %879 = vmatprep.subr.mxu0 0.0
    %v880 = vand.u32 %v653, 4294901760
    %v881 = vsub.f32 %v653, %v880
    %882 = vmatpush1.msra.mxu0 %v881
    %883 = vmatprep.subr.mxu0 0.0
    %v884 = vand.u32 %v654, 4294901760
    %v885 = vsub.f32 %v654, %v884
    %886 = vmatpush1.msra.mxu0 %v885
    %887 = vmatprep.subr.mxu0 0.0
    %v888 = vand.u32 %v655, 4294901760
    %v889 = vsub.f32 %v655, %v888
    %890 = vmatpush1.msra.mxu0 %v889
    %891 = vmatprep.subr.mxu0 0.0
    %v892 = vand.u32 %v656, 4294901760
    %v893 = vsub.f32 %v656, %v892
    %894 = vmatpush1.msra.mxu0 %v893
    %895 = vmatprep.subr.mxu0 0.0
    %v896 = vand.u32 %v657, 4294901760
    %v897 = vsub.f32 %v657, %v896
    %898 = vmatpush1.msra.mxu0 %v897
    %899 = vmatprep.subr.mxu0 0.0
    %900 = vmatpush1.msra.mxu0 0.0
    %901 = vmatprep.subr.mxu0 0.0
    %902 = vmatpush1.msra.mxu0 0.0
    %903 = vmatprep.subr.mxu0 0.0
    %904 = vmatpush1.msra.mxu0 0.0
    %905 = vmatprep.subr.mxu0 0.0
    %906 = vmatpush1.msra.mxu0 0.0
    %907 = vmatprep.subr.mxu0 0.0
    %908 = vmatpush1.msra.mxu0 0.0
    %909 = vmatprep.subr.mxu0 0.0
    %910 = vmatpush1.msra.mxu0 0.0
    %911 = vmatprep.subr.mxu0 0.0
    %912 = vmatpush1.msra.mxu0 0.0
    %913 = vmatprep.subr.mxu0 0.0
    %914 = vmatpush1.msra.mxu0 0.0
    %915 = vmatprep.subr.mxu0 0.0
    %916 = vmatpush1.msra.mxu0 0.0
    %917 = vmatprep.subr.mxu0 0.0
    %918 = vmatpush1.msra.mxu0 0.0
    %919 = vmatprep.subr.mxu0 0.0
    %920 = vmatpush1.msra.mxu0 0.0
    %921 = vmatprep.subr.mxu0 0.0
    %922 = vmatpush1.msra.mxu0 0.0
    %923 = vmatprep.subr.mxu0 0.0
    %924 = vmatpush1.msra.mxu0 0.0
    %925 = vmatprep.subr.mxu0 0.0
    %926 = vmatpush1.msra.mxu0 0.0
    %927 = vmatprep.subr.mxu0 0.0
    %928 = vmatpush1.msra.mxu0 0.0
    %929 = vmatprep.subr.mxu0 0.0
    %930 = vmatpush1.msra.mxu0 0.0
    %931 = vmatprep.subr.mxu0 0.0
    %932 = vmatpush1.msra.mxu0 0.0
    %933 = vmatprep.subr.mxu0 0.0
    %934 = vmatpush1.msra.mxu0 0.0
    %935 = vmatprep.subr.mxu0 0.0
    %936 = vmatpush1.msra.mxu0 0.0
    %937 = vmatprep.subr.mxu0 0.0
    %938 = vmatpush1.msra.mxu0 0.0
    %939 = vmatprep.subr.mxu0 0.0
    %940 = vmatpush1.msra.mxu0 0.0
    %941 = vmatprep.subr.mxu0 0.0
    %942 = vmatpush1.msra.mxu0 0.0
    %943 = vmatprep.subr.mxu0 0.0
    %944 = vmatpush1.msra.mxu0 0.0
    %945 = vmatprep.subr.mxu0 0.0
    %946 = vmatpush1.msra.mxu0 0.0
    %947 = vmatprep.mubr.f32.mxu0 0.0
    %v948 = vand.u32 %v671, 4294901760
    %v949 = vsub.f32 %v671, %v948
    %950 = vmatmul.mubr.f32.gmra.mrb[0].mxu0 %v949
    %v951 = vpop.f32.mrb[0].mxu0
    %v952 = vadd.f32 %v864, %v951
    %v953 = vpop.f32.mrb[0].mxu0
    %954 = vdwg.mxu0
    %955 = vmatprep.subr.mxu0 0.0
    %v956 = vand.u32 %v650, 4294901760
    %957 = vmatpush1.msra.mxu0 %v956
    %958 = vmatprep.subr.mxu0 0.0
    %v959 = vand.u32 %v651, 4294901760
    %960 = vmatpush1.msra.mxu0 %v959
    %961 = vmatprep.subr.mxu0 0.0
    %v962 = vand.u32 %v652, 4294901760
    %963 = vmatpush1.msra.mxu0 %v962
    %964 = vmatprep.subr.mxu0 0.0
    %v965 = vand.u32 %v653, 4294901760
    %966 = vmatpush1.msra.mxu0 %v965
    %967 = vmatprep.subr.mxu0 0.0
    %v968 = vand.u32 %v654, 4294901760
    %969 = vmatpush1.msra.mxu0 %v968
    %970 = vmatprep.subr.mxu0 0.0
    %v971 = vand.u32 %v655, 4294901760
    %972 = vmatpush1.msra.mxu0 %v971
    %973 = vmatprep.subr.mxu0 0.0
    %v974 = vand.u32 %v656, 4294901760
    %975 = vmatpush1.msra.mxu0 %v974
    %976 = vmatprep.subr.mxu0 0.0
    %v977 = vand.u32 %v657, 4294901760
    %978 = vmatpush1.msra.mxu0 %v977
    %979 = vmatprep.subr.mxu0 0.0
    %980 = vmatpush1.msra.mxu0 0.0
    %981 = vmatprep.subr.mxu0 0.0
    %982 = vmatpush1.msra.mxu0 0.0
    %983 = vmatprep.subr.mxu0 0.0
    %984 = vmatpush1.msra.mxu0 0.0
    %985 = vmatprep.subr.mxu0 0.0
    %986 = vmatpush1.msra.mxu0 0.0
    %987 = vmatprep.subr.mxu0 0.0
    %988 = vmatpush1.msra.mxu0 0.0
    %989 = vmatprep.subr.mxu0 0.0
    %990 = vmatpush1.msra.mxu0 0.0
    %991 = vmatprep.subr.mxu0 0.0
    %992 = vmatpush1.msra.mxu0 0.0
    %993 = vmatprep.subr.mxu0 0.0
    %994 = vmatpush1.msra.mxu0 0.0
    %995 = vmatprep.subr.mxu0 0.0
    %996 = vmatpush1.msra.mxu0 0.0
    %997 = vmatprep.subr.mxu0 0.0
    %998 = vmatpush1.msra.mxu0 0.0
    %999 = vmatprep.subr.mxu0 0.0
    %1000 = vmatpush1.msra.mxu0 0.0
    %1001 = vmatprep.subr.mxu0 0.0
    %1002 = vmatpush1.msra.mxu0 0.0
    %1003 = vmatprep.subr.mxu0 0.0
    %1004 = vmatpush1.msra.mxu0 0.0
    %1005 = vmatprep.subr.mxu0 0.0
    %1006 = vmatpush1.msra.mxu0 0.0
    %1007 = vmatprep.subr.mxu0 0.0
    %1008 = vmatpush1.msra.mxu0 0.0
    %1009 = vmatprep.subr.mxu0 0.0
    %1010 = vmatpush1.msra.mxu0 0.0
    %1011 = vmatprep.subr.mxu0 0.0
    %1012 = vmatpush1.msra.mxu0 0.0
    %1013 = vmatprep.subr.mxu0 0.0
    %1014 = vmatpush1.msra.mxu0 0.0
    %1015 = vmatprep.subr.mxu0 0.0
    %1016 = vmatpush1.msra.mxu0 0.0
    %1017 = vmatprep.subr.mxu0 0.0
    %1018 = vmatpush1.msra.mxu0 0.0
    %1019 = vmatprep.subr.mxu0 0.0
    %1020 = vmatpush1.msra.mxu0 0.0
    %1021 = vmatprep.subr.mxu0 0.0
    %1022 = vmatpush1.msra.mxu0 0.0
    %1023 = vmatprep.subr.mxu0 0.0
    %1024 = vmatpush1.msra.mxu0 0.0
    %1025 = vmatprep.subr.mxu0 0.0
    %1026 = vmatpush1.msra.mxu0 0.0
    %1027 = vmatprep.mubr.f32.mxu0 0.0
    %v1028 = vand.u32 %v671, 4294901760
    %v1029 = vsub.f32 %v671, %v1028
    %v1030 = vand.u32 %v1029, 4294901760
    %1031 = vmatmul.mubr.f32.gmra.mrb[0].mxu0 %v1030
    %v1032 = vpop.f32.mrb[0].mxu0
    %v1033 = vadd.f32 %v952, %v1032
    %v1034 = vpop.f32.mrb[0].mxu0
    %1035 = vdwg.mxu0
    %1036 = vmatprep.subr.mxu0 0.0
    %v1037 = vand.u32 %v650, 4294901760
    %v1038 = vsub.f32 %v650, %v1037
    %v1039 = vand.u32 %v1038, 4294901760
    %1040 = vmatpush1.msra.mxu0 %v1039
    %1041 = vmatprep.subr.mxu0 0.0
    %v1042 = vand.u32 %v651, 4294901760
    %v1043 = vsub.f32 %v651, %v1042
    %v1044 = vand.u32 %v1043, 4294901760
    %1045 = vmatpush1.msra.mxu0 %v1044
    %1046 = vmatprep.subr.mxu0 0.0
    %v1047 = vand.u32 %v652, 4294901760
    %v1048 = vsub.f32 %v652, %v1047
    %v1049 = vand.u32 %v1048, 4294901760
    %1050 = vmatpush1.msra.mxu0 %v1049
    %1051 = vmatprep.subr.mxu0 0.0
    %v1052 = vand.u32 %v653, 4294901760
    %v1053 = vsub.f32 %v653, %v1052
    %v1054 = vand.u32 %v1053, 4294901760
    %1055 = vmatpush1.msra.mxu0 %v1054
    %1056 = vmatprep.subr.mxu0 0.0
    %v1057 = vand.u32 %v654, 4294901760
    %v1058 = vsub.f32 %v654, %v1057
    %v1059 = vand.u32 %v1058, 4294901760
    %1060 = vmatpush1.msra.mxu0 %v1059
    %1061 = vmatprep.subr.mxu0 0.0
    %v1062 = vand.u32 %v655, 4294901760
    %v1063 = vsub.f32 %v655, %v1062
    %v1064 = vand.u32 %v1063, 4294901760
    %1065 = vmatpush1.msra.mxu0 %v1064
    %1066 = vmatprep.subr.mxu0 0.0
    %v1067 = vand.u32 %v656, 4294901760
    %v1068 = vsub.f32 %v656, %v1067
    %v1069 = vand.u32 %v1068, 4294901760
    %1070 = vmatpush1.msra.mxu0 %v1069
    %1071 = vmatprep.subr.mxu0 0.0
    %v1072 = vand.u32 %v657, 4294901760
    %v1073 = vsub.f32 %v657, %v1072
    %v1074 = vand.u32 %v1073, 4294901760
    %1075 = vmatpush1.msra.mxu0 %v1074
    %1076 = vmatprep.subr.mxu0 0.0
    %1077 = vmatpush1.msra.mxu0 0.0
    %1078 = vmatprep.subr.mxu0 0.0
    %1079 = vmatpush1.msra.mxu0 0.0
    %1080 = vmatprep.subr.mxu0 0.0
    %1081 = vmatpush1.msra.mxu0 0.0
    %1082 = vmatprep.subr.mxu0 0.0
    %1083 = vmatpush1.msra.mxu0 0.0
    %1084 = vmatprep.subr.mxu0 0.0
    %1085 = vmatpush1.msra.mxu0 0.0
    %1086 = vmatprep.subr.mxu0 0.0
    %1087 = vmatpush1.msra.mxu0 0.0
    %1088 = vmatprep.subr.mxu0 0.0
    %1089 = vmatpush1.msra.mxu0 0.0
    %1090 = vmatprep.subr.mxu0 0.0
    %1091 = vmatpush1.msra.mxu0 0.0
    %1092 = vmatprep.subr.mxu0 0.0
    %1093 = vmatpush1.msra.mxu0 0.0
    %1094 = vmatprep.subr.mxu0 0.0
    %1095 = vmatpush1.msra.mxu0 0.0
    %1096 = vmatprep.subr.mxu0 0.0
    %1097 = vmatpush1.msra.mxu0 0.0
    %1098 = vmatprep.subr.mxu0 0.0
    %1099 = vmatpush1.msra.mxu0 0.0
    %1100 = vmatprep.subr.mxu0 0.0
    %1101 = vmatpush1.msra.mxu0 0.0
    %1102 = vmatprep.subr.mxu0 0.0
    %1103 = vmatpush1.msra.mxu0 0.0
    %1104 = vmatprep.subr.mxu0 0.0
    %1105 = vmatpush1.msra.mxu0 0.0
    %1106 = vmatprep.subr.mxu0 0.0
    %1107 = vmatpush1.msra.mxu0 0.0
    %1108 = vmatprep.subr.mxu0 0.0
    %1109 = vmatpush1.msra.mxu0 0.0
    %1110 = vmatprep.subr.mxu0 0.0
    %1111 = vmatpush1.msra.mxu0 0.0
    %1112 = vmatprep.subr.mxu0 0.0
    %1113 = vmatpush1.msra.mxu0 0.0
    %1114 = vmatprep.subr.mxu0 0.0
    %1115 = vmatpush1.msra.mxu0 0.0
    %1116 = vmatprep.subr.mxu0 0.0
    %1117 = vmatpush1.msra.mxu0 0.0
    %1118 = vmatprep.subr.mxu0 0.0
    %1119 = vmatpush1.msra.mxu0 0.0
    %1120 = vmatprep.subr.mxu0 0.0
    %1121 = vmatpush1.msra.mxu0 0.0
    %1122 = vmatprep.subr.mxu0 0.0
    %1123 = vmatpush1.msra.mxu0 0.0
    %1124 = vmatprep.mubr.f32.mxu0 0.0
    %v1125 = vand.u32 %v671, 4294901760
    %1126 = vmatmul.mubr.f32.gmra.mrb[0].mxu0 %v1125
    %v1127 = vpop.f32.mrb[0].mxu0
    %v1128 = vadd.f32 %v1033, %v1127
    %v1129 = vpop.f32.mrb[0].mxu0
    %1130 = vdwg.mxu0
    %1131 = vmatprep.subr.mxu0 0.0
    %v1132 = vand.u32 %v650, 4294901760
    %1133 = vmatpush1.msra.mxu0 %v1132
    %1134 = vmatprep.subr.mxu0 0.0
    %v1135 = vand.u32 %v651, 4294901760
    %1136 = vmatpush1.msra.mxu0 %v1135
    %1137 = vmatprep.subr.mxu0 0.0
    %v1138 = vand.u32 %v652, 4294901760
    %1139 = vmatpush1.msra.mxu0 %v1138
    %1140 = vmatprep.subr.mxu0 0.0
    %v1141 = vand.u32 %v653, 4294901760
    %1142 = vmatpush1.msra.mxu0 %v1141
    %1143 = vmatprep.subr.mxu0 0.0
    %v1144 = vand.u32 %v654, 4294901760
    %1145 = vmatpush1.msra.mxu0 %v1144
    %1146 = vmatprep.subr.mxu0 0.0
    %v1147 = vand.u32 %v655, 4294901760
    %1148 = vmatpush1.msra.mxu0 %v1147
    %1149 = vmatprep.subr.mxu0 0.0
    %v1150 = vand.u32 %v656, 4294901760
    %1151 = vmatpush1.msra.mxu0 %v1150
    %1152 = vmatprep.subr.mxu0 0.0
    %v1153 = vand.u32 %v657, 4294901760
    %1154 = vmatpush1.msra.mxu0 %v1153
    %1155 = vmatprep.subr.mxu0 0.0
    %1156 = vmatpush1.msra.mxu0 0.0
    %1157 = vmatprep.subr.mxu0 0.0
    %1158 = vmatpush1.msra.mxu0 0.0
    %1159 = vmatprep.subr.mxu0 0.0
    %1160 = vmatpush1.msra.mxu0 0.0
    %1161 = vmatprep.subr.mxu0 0.0
    %1162 = vmatpush1.msra.mxu0 0.0
    %1163 = vmatprep.subr.mxu0 0.0
    %1164 = vmatpush1.msra.mxu0 0.0
    %1165 = vmatprep.subr.mxu0 0.0
    %1166 = vmatpush1.msra.mxu0 0.0
    %1167 = vmatprep.subr.mxu0 0.0
    %1168 = vmatpush1.msra.mxu0 0.0
    %1169 = vmatprep.subr.mxu0 0.0
    %1170 = vmatpush1.msra.mxu0 0.0
    %1171 = vmatprep.subr.mxu0 0.0
    %1172 = vmatpush1.msra.mxu0 0.0
    %1173 = vmatprep.subr.mxu0 0.0
    %1174 = vmatpush1.msra.mxu0 0.0
    %1175 = vmatprep.subr.mxu0 0.0
    %1176 = vmatpush1.msra.mxu0 0.0
    %1177 = vmatprep.subr.mxu0 0.0
    %1178 = vmatpush1.msra.mxu0 0.0
    %1179 = vmatprep.subr.mxu0 0.0
    %1180 = vmatpush1.msra.mxu0 0.0
    %1181 = vmatprep.subr.mxu0 0.0
    %1182 = vmatpush1.msra.mxu0 0.0
    %1183 = vmatprep.subr.mxu0 0.0
    %1184 = vmatpush1.msra.mxu0 0.0
    %1185 = vmatprep.subr.mxu0 0.0
    %1186 = vmatpush1.msra.mxu0 0.0
    %1187 = vmatprep.subr.mxu0 0.0
    %1188 = vmatpush1.msra.mxu0 0.0
    %1189 = vmatprep.subr.mxu0 0.0
    %1190 = vmatpush1.msra.mxu0 0.0
    %1191 = vmatprep.subr.mxu0 0.0
    %1192 = vmatpush1.msra.mxu0 0.0
    %1193 = vmatprep.subr.mxu0 0.0
    %1194 = vmatpush1.msra.mxu0 0.0
    %1195 = vmatprep.subr.mxu0 0.0
    %1196 = vmatpush1.msra.mxu0 0.0
    %1197 = vmatprep.subr.mxu0 0.0
    %1198 = vmatpush1.msra.mxu0 0.0
    %1199 = vmatprep.subr.mxu0 0.0
    %1200 = vmatpush1.msra.mxu0 0.0
    %1201 = vmatprep.subr.mxu0 0.0
    %1202 = vmatpush1.msra.mxu0 0.0
    %1203 = vmatprep.mubr.f32.mxu0 0.0
    %v1204 = vand.u32 %v671, 4294901760
    %1205 = vmatmul.mubr.f32.gmra.mrb[0].mxu0 %v1204
    %v1206 = vpop.f32.mrb[0].mxu0
    %v1207 = vadd.f32 %v1128, %v1206
    %v1208 = vpop.f32.mrb[0].mxu0
    %1209 = vdwg.mxu0
    %v1210 = vxor.u32 %v1207, 2147483648
    %v1211 = vmul.f32 %v1210, 1.442695
    %v1212 = vpow.pop %v1211
    %v1213 = vadd.f32 %v1212, 1.0
    %v1214 = vrcp.pop %v1213
    %v1215 = vmul.f32 1.0, %v1214
    %v1216 = vtanh.pop %v1207
    %v1217 = vmul.f32 %v1215, %v660
    %1219 = vrot.lane.b32.xlu0 %v1216, 64
    %v1220 = vpop.permute.xlu0 %1219
    %v1222 = vmul.f32 %v1215, %v1220
    %1224 = vrot.lane.b32.xlu0 %v1222, 32
    %v1225 = vpop.permute.xlu0 %1224
    %v1227 = vadd.f32 %v1217, %v1225
    %v1228 = vtanh.pop %v1227
    %1230 = vrot.lane.b32.xlu0 %v1228, 64
    %v1231 = vpop.permute.xlu0 %1230
    %v1233 = vmul.f32 %v1215, %v1231
    %1235 = vrot.lane.b32.xlu0 %v1233, 32
    %v1236 = vpop.permute.xlu0 %1235
    %v1238 = vsel %vm75, %v1236, %v1227
    %v1239 = vsel %vm77, %v1238, 0.0
    %1240 = vst [vmem:[%s659] sm:$0x1] %v1239
    %v1241 = vld [vmem:[#allocation5] sm:$0xff]
    %v1242 = vld [vmem:[#allocation5 + $0x8] sm:$0xff]
    %v1243 = vld [vmem:[#allocation5 + $0x10] sm:$0xff]
    %v1244 = vld [vmem:[#allocation5 + $0x18] sm:$0xff]
    %v1245 = vld [vmem:[#allocation5 + $0x20] sm:$0xff]
    %v1246 = vsel %vm75, %v1236, 0
    %1248 = vmatprep.subr.mxu0 0.0
    %v1249 = vand.u32 %v1241, 4294901760
    %1250 = vmatpush1.msra.mxu0 %v1249
    %1251 = vmatprep.subr.mxu0 0.0
    %v1252 = vand.u32 %v1242, 4294901760
    %1253 = vmatpush1.msra.mxu0 %v1252
    %1254 = vmatprep.subr.mxu0 0.0
    %v1255 = vand.u32 %v1243, 4294901760
    %1256 = vmatpush1.msra.mxu0 %v1255
    %1257 = vmatprep.subr.mxu0 0.0
    %v1258 = vand.u32 %v1244, 4294901760
    %1259 = vmatpush1.msra.mxu0 %v1258
    %1260 = vmatprep.subr.mxu0 0.0
    %1261 = vmatpush1.msra.mxu0 0.0
    %1262 = vmatprep.subr.mxu0 0.0
    %1263 = vmatpush1.msra.mxu0 0.0
    %1264 = vmatprep.subr.mxu0 0.0
    %1265 = vmatpush1.msra.mxu0 0.0
    %1266 = vmatprep.subr.mxu0 0.0
    %1267 = vmatpush1.msra.mxu0 0.0
    %1268 = vmatprep.subr.mxu0 0.0
    %1269 = vmatpush1.msra.mxu0 0.0
    %1270 = vmatprep.subr.mxu0 0.0
    %1271 = vmatpush1.msra.mxu0 0.0
    %1272 = vmatprep.subr.mxu0 0.0
    %1273 = vmatpush1.msra.mxu0 0.0
    %1274 = vmatprep.subr.mxu0 0.0
    %1275 = vmatpush1.msra.mxu0 0.0
    %1276 = vmatprep.subr.mxu0 0.0
    %1277 = vmatpush1.msra.mxu0 0.0
    %1278 = vmatprep.subr.mxu0 0.0
    %1279 = vmatpush1.msra.mxu0 0.0
    %1280 = vmatprep.subr.mxu0 0.0
    %1281 = vmatpush1.msra.mxu0 0.0
    %1282 = vmatprep.subr.mxu0 0.0
    %1283 = vmatpush1.msra.mxu0 0.0
    %1284 = vmatprep.subr.mxu0 0.0
    %1285 = vmatpush1.msra.mxu0 0.0
    %1286 = vmatprep.subr.mxu0 0.0
    %1287 = vmatpush1.msra.mxu0 0.0
    %1288 = vmatprep.subr.mxu0 0.0
    %1289 = vmatpush1.msra.mxu0 0.0
    %1290 = vmatprep.subr.mxu0 0.0
    %1291 = vmatpush1.msra.mxu0 0.0
    %1292 = vmatprep.subr.mxu0 0.0
    %1293 = vmatpush1.msra.mxu0 0.0
    %1294 = vmatprep.subr.mxu0 0.0
    %1295 = vmatpush1.msra.mxu0 0.0
    %1296 = vmatprep.subr.mxu0 0.0
    %1297 = vmatpush1.msra.mxu0 0.0
    %1298 = vmatprep.subr.mxu0 0.0
    %1299 = vmatpush1.msra.mxu0 0.0
    %1300 = vmatprep.subr.mxu0 0.0
    %1301 = vmatpush1.msra.mxu0 0.0
    %1302 = vmatprep.subr.mxu0 0.0
    %1303 = vmatpush1.msra.mxu0 0.0
    %1304 = vmatprep.subr.mxu0 0.0
    %1305 = vmatpush1.msra.mxu0 0.0
    %1306 = vmatprep.subr.mxu0 0.0
    %1307 = vmatpush1.msra.mxu0 0.0
    %1308 = vmatprep.subr.mxu0 0.0
    %1309 = vmatpush1.msra.mxu0 0.0
    %1310 = vmatprep.subr.mxu0 0.0
    %1311 = vmatpush1.msra.mxu0 0.0
    %1312 = vmatprep.subr.mxu0 0.0
    %1313 = vmatpush1.msra.mxu0 0.0
    %1314 = vmatprep.subr.mxu0 0.0
    %1315 = vmatpush1.msra.mxu0 0.0
    %1316 = vmatprep.mubr.f32.mxu0 0.0
    %v1317 = vand.u32 %v1246, 4294901760
    %v1318 = vsub.f32 %v1246, %v1317
    %v1319 = vand.u32 %v1318, 4294901760
    %v1320 = vsub.f32 %v1318, %v1319
    %v1321 = vand.u32 %v1320, 4294901760
    %1322 = vmatmul.mubr.f32.gmra.mrb[0].mxu0 %v1321
    %v1323 = vpop.f32.mrb[0].mxu0
    %v1324 = vadd.f32 %v1245, %v1323
    %v1325 = vpop.f32.mrb[0].mxu0
    %1326 = vdwg.mxu0
    %1327 = vmatprep.subr.mxu0 0.0
    %v1328 = vand.u32 %v1241, 4294901760
    %v1329 = vsub.f32 %v1241, %v1328
    %v1330 = vand.u32 %v1329, 4294901760
    %v1331 = vsub.f32 %v1329, %v1330
    %v1332 = vand.u32 %v1331, 4294901760
    %1333 = vmatpush1.msra.mxu0 %v1332
    %1334 = vmatprep.subr.mxu0 0.0
    %v1335 = vand.u32 %v1242, 4294901760
    %v1336 = vsub.f32 %v1242, %v1335
    %v1337 = vand.u32 %v1336, 4294901760
    %v1338 = vsub.f32 %v1336, %v1337
    %v1339 = vand.u32 %v1338, 4294901760
    %1340 = vmatpush1.msra.mxu0 %v1339
    %1341 = vmatprep.subr.mxu0 0.0
    %v1342 = vand.u32 %v1243, 4294901760
    %v1343 = vsub.f32 %v1243, %v1342
    %v1344 = vand.u32 %v1343, 4294901760
    %v1345 = vsub.f32 %v1343, %v1344
    %v1346 = vand.u32 %v1345, 4294901760
    %1347 = vmatpush1.msra.mxu0 %v1346
    %1348 = vmatprep.subr.mxu0 0.0
    %v1349 = vand.u32 %v1244, 4294901760
    %v1350 = vsub.f32 %v1244, %v1349
    %v1351 = vand.u32 %v1350, 4294901760
    %v1352 = vsub.f32 %v1350, %v1351
    %v1353 = vand.u32 %v1352, 4294901760
    %1354 = vmatpush1.msra.mxu0 %v1353
    %1355 = vmatprep.subr.mxu0 0.0
    %1356 = vmatpush1.msra.mxu0 0.0
    %1357 = vmatprep.subr.mxu0 0.0
    %1358 = vmatpush1.msra.mxu0 0.0
    %1359 = vmatprep.subr.mxu0 0.0
    %1360 = vmatpush1.msra.mxu0 0.0
    %1361 = vmatprep.subr.mxu0 0.0
    %1362 = vmatpush1.msra.mxu0 0.0
    %1363 = vmatprep.subr.mxu0 0.0
    %1364 = vmatpush1.msra.mxu0 0.0
    %1365 = vmatprep.subr.mxu0 0.0
    %1366 = vmatpush1.msra.mxu0 0.0
    %1367 = vmatprep.subr.mxu0 0.0
    %1368 = vmatpush1.msra.mxu0 0.0
    %1369 = vmatprep.subr.mxu0 0.0
    %1370 = vmatpush1.msra.mxu0 0.0
    %1371 = vmatprep.subr.mxu0 0.0
    %1372 = vmatpush1.msra.mxu0 0.0
    %1373 = vmatprep.subr.mxu0 0.0
    %1374 = vmatpush1.msra.mxu0 0.0
    %1375 = vmatprep.subr.mxu0 0.0
    %1376 = vmatpush1.msra.mxu0 0.0
    %1377 = vmatprep.subr.mxu0 0.0
    %1378 = vmatpush1.msra.mxu0 0.0
    %1379 = vmatprep.subr.mxu0 0.0
    %1380 = vmatpush1.msra.mxu0 0.0
    %1381 = vmatprep.subr.mxu0 0.0
    %1382 = vmatpush1.msra.mxu0 0.0
    %1383 = vmatprep.subr.mxu0 0.0
    %1384 = vmatpush1.msra.mxu0 0.0
    %1385 = vmatprep.subr.mxu0 0.0
    %1386 = vmatpush1.msra.mxu0 0.0
    %1387 = vmatprep.subr.mxu0 0.0
    %1388 = vmatpush1.msra.mxu0 0.0
    %1389 = vmatprep.subr.mxu0 0.0
    %1390 = vmatpush1.msra.mxu0 0.0
    %1391 = vmatprep.subr.mxu0 0.0
    %1392 = vmatpush1.msra.mxu0 0.0
    %1393 = vmatprep.subr.mxu0 0.0
    %1394 = vmatpush1.msra.mxu0 0.0
    %1395 = vmatprep.subr.mxu0 0.0
    %1396 = vmatpush1.msra.mxu0 0.0
    %1397 = vmatprep.subr.mxu0 0.0
    %1398 = vmatpush1.msra.mxu0 0.0
    %1399 = vmatprep.subr.mxu0 0.0
    %1400 = vmatpush1.msra.mxu0 0.0
    %1401 = vmatprep.subr.mxu0 0.0
    %1402 = vmatpush1.msra.mxu0 0.0
    %1403 = vmatprep.subr.mxu0 0.0
    %1404 = vmatpush1.msra.mxu0 0.0
    %1405 = vmatprep.subr.mxu0 0.0
    %1406 = vmatpush1.msra.mxu0 0.0
    %1407 = vmatprep.subr.mxu0 0.0
    %1408 = vmatpush1.msra.mxu0 0.0
    %1409 = vmatprep.subr.mxu0 0.0
    %1410 = vmatpush1.msra.mxu0 0.0
    %1411 = vmatprep.mubr.f32.mxu0 0.0
    %v1412 = vand.u32 %v1246, 4294901760
    %1413 = vmatmul.mubr.f32.gmra.mrb[0].mxu0 %v1412
    %v1414 = vpop.f32.mrb[0].mxu0
    %v1415 = vadd.f32 %v1324, %v1414
    %v1416 = vpop.f32.mrb[0].mxu0
    %1417 = vdwg.mxu0
    %1418 = vmatprep.subr.mxu0 0.0
    %v1419 = vand.u32 %v1241, 4294901760
    %v1420 = vsub.f32 %v1241, %v1419
    %1421 = vmatpush1.msra.mxu0 %v1420
    %1422 = vmatprep.subr.mxu0 0.0
    %v1423 = vand.u32 %v1242, 4294901760
    %v1424 = vsub.f32 %v1242, %v1423
    %1425 = vmatpush1.msra.mxu0 %v1424
    %1426 = vmatprep.subr.mxu0 0.0
    %v1427 = vand.u32 %v1243, 4294901760
    %v1428 = vsub.f32 %v1243, %v1427
    %1429 = vmatpush1.msra.mxu0 %v1428
    %1430 = vmatprep.subr.mxu0 0.0
    %v1431 = vand.u32 %v1244, 4294901760
    %v1432 = vsub.f32 %v1244, %v1431
    %1433 = vmatpush1.msra.mxu0 %v1432
    %1434 = vmatprep.subr.mxu0 0.0
    %1435 = vmatpush1.msra.mxu0 0.0
    %1436 = vmatprep.subr.mxu0 0.0
    %1437 = vmatpush1.msra.mxu0 0.0
    %1438 = vmatprep.subr.mxu0 0.0
    %1439 = vmatpush1.msra.mxu0 0.0
    %1440 = vmatprep.subr.mxu0 0.0
    %1441 = vmatpush1.msra.mxu0 0.0
    %1442 = vmatprep.subr.mxu0 0.0
    %1443 = vmatpush1.msra.mxu0 0.0
    %1444 = vmatprep.subr.mxu0 0.0
    %1445 = vmatpush1.msra.mxu0 0.0
    %1446 = vmatprep.subr.mxu0 0.0
    %1447 = vmatpush1.msra.mxu0 0.0
    %1448 = vmatprep.subr.mxu0 0.0
    %1449 = vmatpush1.msra.mxu0 0.0
    %1450 = vmatprep.subr.mxu0 0.0
    %1451 = vmatpush1.msra.mxu0 0.0
    %1452 = vmatprep.subr.mxu0 0.0
    %1453 = vmatpush1.msra.mxu0 0.0
    %1454 = vmatprep.subr.mxu0 0.0
    %1455 = vmatpush1.msra.mxu0 0.0
    %1456 = vmatprep.subr.mxu0 0.0
    %1457 = vmatpush1.msra.mxu0 0.0
    %1458 = vmatprep.subr.mxu0 0.0
    %1459 = vmatpush1.msra.mxu0 0.0
    %1460 = vmatprep.subr.mxu0 0.0
    %1461 = vmatpush1.msra.mxu0 0.0
    %1462 = vmatprep.subr.mxu0 0.0
    %1463 = vmatpush1.msra.mxu0 0.0
    %1464 = vmatprep.subr.mxu0 0.0
    %1465 = vmatpush1.msra.mxu0 0.0
    %1466 = vmatprep.subr.mxu0 0.0
    %1467 = vmatpush1.msra.mxu0 0.0
    %1468 = vmatprep.subr.mxu0 0.0
    %1469 = vmatpush1.msra.mxu0 0.0
    %1470 = vmatprep.subr.mxu0 0.0
    %1471 = vmatpush1.msra.mxu0 0.0
    %1472 = vmatprep.subr.mxu0 0.0
    %1473 = vmatpush1.msra.mxu0 0.0
    %1474 = vmatprep.subr.mxu0 0.0
    %1475 = vmatpush1.msra.mxu0 0.0
    %1476 = vmatprep.subr.mxu0 0.0
    %1477 = vmatpush1.msra.mxu0 0.0
    %1478 = vmatprep.subr.mxu0 0.0
    %1479 = vmatpush1.msra.mxu0 0.0
    %1480 = vmatprep.subr.mxu0 0.0
    %1481 = vmatpush1.msra.mxu0 0.0
    %1482 = vmatprep.subr.mxu0 0.0
    %1483 = vmatpush1.msra.mxu0 0.0
    %1484 = vmatprep.subr.mxu0 0.0
    %1485 = vmatpush1.msra.mxu0 0.0
    %1486 = vmatprep.subr.mxu0 0.0
    %1487 = vmatpush1.msra.mxu0 0.0
    %1488 = vmatprep.subr.mxu0 0.0
    %1489 = vmatpush1.msra.mxu0 0.0
    %1490 = vmatprep.mubr.f32.mxu0 0.0
    %v1491 = vand.u32 %v1246, 4294901760
    %v1492 = vsub.f32 %v1246, %v1491
    %1493 = vmatmul.mubr.f32.gmra.mrb[0].mxu0 %v1492
    %v1494 = vpop.f32.mrb[0].mxu0
    %v1495 = vadd.f32 %v1415, %v1494
    %v1496 = vpop.f32.mrb[0].mxu0
    %1497 = vdwg.mxu0
    %1498 = vmatprep.subr.mxu0 0.0
    %v1499 = vand.u32 %v1241, 4294901760
    %1500 = vmatpush1.msra.mxu0 %v1499
    %1501 = vmatprep.subr.mxu0 0.0
    %v1502 = vand.u32 %v1242, 4294901760
    %1503 = vmatpush1.msra.mxu0 %v1502
    %1504 = vmatprep.subr.mxu0 0.0
    %v1505 = vand.u32 %v1243, 4294901760
    %1506 = vmatpush1.msra.mxu0 %v1505
    %1507 = vmatprep.subr.mxu0 0.0
    %v1508 = vand.u32 %v1244, 4294901760
    %1509 = vmatpush1.msra.mxu0 %v1508
    %1510 = vmatprep.subr.mxu0 0.0
    %1511 = vmatpush1.msra.mxu0 0.0
    %1512 = vmatprep.subr.mxu0 0.0
    %1513 = vmatpush1.msra.mxu0 0.0
    %1514 = vmatprep.subr.mxu0 0.0
    %1515 = vmatpush1.msra.mxu0 0.0
    %1516 = vmatprep.subr.mxu0 0.0
    %1517 = vmatpush1.msra.mxu0 0.0
    %1518 = vmatprep.subr.mxu0 0.0
    %1519 = vmatpush1.msra.mxu0 0.0
    %1520 = vmatprep.subr.mxu0 0.0
    %1521 = vmatpush1.msra.mxu0 0.0
    %1522 = vmatprep.subr.mxu0 0.0
    %1523 = vmatpush1.msra.mxu0 0.0
    %1524 = vmatprep.subr.mxu0 0.0
    %1525 = vmatpush1.msra.mxu0 0.0
    %1526 = vmatprep.subr.mxu0 0.0
    %1527 = vmatpush1.msra.mxu0 0.0
    %1528 = vmatprep.subr.mxu0 0.0
    %1529 = vmatpush1.msra.mxu0 0.0
    %1530 = vmatprep.subr.mxu0 0.0
    %1531 = vmatpush1.msra.mxu0 0.0
    %1532 = vmatprep.subr.mxu0 0.0
    %1533 = vmatpush1.msra.mxu0 0.0
    %1534 = vmatprep.subr.mxu0 0.0
    %1535 = vmatpush1.msra.mxu0 0.0
    %1536 = vmatprep.subr.mxu0 0.0
    %1537 = vmatpush1.msra.mxu0 0.0
    %1538 = vmatprep.subr.mxu0 0.0
    %1539 = vmatpush1.msra.mxu0 0.0
    %1540 = vmatprep.subr.mxu0 0.0
    %1541 = vmatpush1.msra.mxu0 0.0
    %1542 = vmatprep.subr.mxu0 0.0
    %1543 = vmatpush1.msra.mxu0 0.0
    %1544 = vmatprep.subr.mxu0 0.0
    %1545 = vmatpush1.msra.mxu0 0.0
    %1546 = vmatprep.subr.mxu0 0.0
    %1547 = vmatpush1.msra.mxu0 0.0
    %1548 = vmatprep.subr.mxu0 0.0
    %1549 = vmatpush1.msra.mxu0 0.0
    %1550 = vmatprep.subr.mxu0 0.0
    %1551 = vmatpush1.msra.mxu0 0.0
    %1552 = vmatprep.subr.mxu0 0.0
    %1553 = vmatpush1.msra.mxu0 0.0
    %1554 = vmatprep.subr.mxu0 0.0
    %1555 = vmatpush1.msra.mxu0 0.0
    %1556 = vmatprep.subr.mxu0 0.0
    %1557 = vmatpush1.msra.mxu0 0.0
    %1558 = vmatprep.subr.mxu0 0.0
    %1559 = vmatpush1.msra.mxu0 0.0
    %1560 = vmatprep.subr.mxu0 0.0
    %1561 = vmatpush1.msra.mxu0 0.0
    %1562 = vmatprep.subr.mxu0 0.0
    %1563 = vmatpush1.msra.mxu0 0.0
    %1564 = vmatprep.subr.mxu0 0.0
    %1565 = vmatpush1.msra.mxu0 0.0
    %1566 = vmatprep.mubr.f32.mxu0 0.0
    %v1567 = vand.u32 %v1246, 4294901760
    %v1568 = vsub.f32 %v1246, %v1567
    %v1569 = vand.u32 %v1568, 4294901760
    %1570 = vmatmul.mubr.f32.gmra.mrb[0].mxu0 %v1569
    %v1571 = vpop.f32.mrb[0].mxu0
    %v1572 = vadd.f32 %v1495, %v1571
    %v1573 = vpop.f32.mrb[0].mxu0
    %1574 = vdwg.mxu0
    %1575 = vmatprep.subr.mxu0 0.0
    %v1576 = vand.u32 %v1241, 4294901760
    %v1577 = vsub.f32 %v1241, %v1576
    %v1578 = vand.u32 %v1577, 4294901760
    %1579 = vmatpush1.msra.mxu0 %v1578
    %1580 = vmatprep.subr.mxu0 0.0
    %v1581 = vand.u32 %v1242, 4294901760
    %v1582 = vsub.f32 %v1242, %v1581
    %v1583 = vand.u32 %v1582, 4294901760
    %1584 = vmatpush1.msra.mxu0 %v1583
    %1585 = vmatprep.subr.mxu0 0.0
    %v1586 = vand.u32 %v1243, 4294901760
    %v1587 = vsub.f32 %v1243, %v1586
    %v1588 = vand.u32 %v1587, 4294901760
    %1589 = vmatpush1.msra.mxu0 %v1588
    %1590 = vmatprep.subr.mxu0 0.0
    %v1591 = vand.u32 %v1244, 4294901760
    %v1592 = vsub.f32 %v1244, %v1591
    %v1593 = vand.u32 %v1592, 4294901760
    %1594 = vmatpush1.msra.mxu0 %v1593
    %1595 = vmatprep.subr.mxu0 0.0
    %1596 = vmatpush1.msra.mxu0 0.0
    %1597 = vmatprep.subr.mxu0 0.0
    %1598 = vmatpush1.msra.mxu0 0.0
    %1599 = vmatprep.subr.mxu0 0.0
    %1600 = vmatpush1.msra.mxu0 0.0
    %1601 = vmatprep.subr.mxu0 0.0
    %1602 = vmatpush1.msra.mxu0 0.0
    %1603 = vmatprep.subr.mxu0 0.0
    %1604 = vmatpush1.msra.mxu0 0.0
    %1605 = vmatprep.subr.mxu0 0.0
    %1606 = vmatpush1.msra.mxu0 0.0
    %1607 = vmatprep.subr.mxu0 0.0
    %1608 = vmatpush1.msra.mxu0 0.0
    %1609 = vmatprep.subr.mxu0 0.0
    %1610 = vmatpush1.msra.mxu0 0.0
    %1611 = vmatprep.subr.mxu0 0.0
    %1612 = vmatpush1.msra.mxu0 0.0
    %1613 = vmatprep.subr.mxu0 0.0
    %1614 = vmatpush1.msra.mxu0 0.0
    %1615 = vmatprep.subr.mxu0 0.0
    %1616 = vmatpush1.msra.mxu0 0.0
    %1617 = vmatprep.subr.mxu0 0.0
    %1618 = vmatpush1.msra.mxu0 0.0
    %1619 = vmatprep.subr.mxu0 0.0
    %1620 = vmatpush1.msra.mxu0 0.0
    %1621 = vmatprep.subr.mxu0 0.0
    %1622 = vmatpush1.msra.mxu0 0.0
    %1623 = vmatprep.subr.mxu0 0.0
    %1624 = vmatpush1.msra.mxu0 0.0
    %1625 = vmatprep.subr.mxu0 0.0
    %1626 = vmatpush1.msra.mxu0 0.0
    %1627 = vmatprep.subr.mxu0 0.0
    %1628 = vmatpush1.msra.mxu0 0.0
    %1629 = vmatprep.subr.mxu0 0.0
    %1630 = vmatpush1.msra.mxu0 0.0
    %1631 = vmatprep.subr.mxu0 0.0
    %1632 = vmatpush1.msra.mxu0 0.0
    %1633 = vmatprep.subr.mxu0 0.0
    %1634 = vmatpush1.msra.mxu0 0.0
    %1635 = vmatprep.subr.mxu0 0.0
    %1636 = vmatpush1.msra.mxu0 0.0
    %1637 = vmatprep.subr.mxu0 0.0
    %1638 = vmatpush1.msra.mxu0 0.0
    %1639 = vmatprep.subr.mxu0 0.0
    %1640 = vmatpush1.msra.mxu0 0.0
    %1641 = vmatprep.subr.mxu0 0.0
    %1642 = vmatpush1.msra.mxu0 0.0
    %1643 = vmatprep.subr.mxu0 0.0
    %1644 = vmatpush1.msra.mxu0 0.0
    %1645 = vmatprep.subr.mxu0 0.0
    %1646 = vmatpush1.msra.mxu0 0.0
    %1647 = vmatprep.subr.mxu0 0.0
    %1648 = vmatpush1.msra.mxu0 0.0
    %1649 = vmatprep.subr.mxu0 0.0
    %1650 = vmatpush1.msra.mxu0 0.0
    %1651 = vmatprep.mubr.f32.mxu0 0.0
    %v1652 = vand.u32 %v1246, 4294901760
    %1653 = vmatmul.mubr.f32.gmra.mrb[0].mxu0 %v1652
    %v1654 = vpop.f32.mrb[0].mxu0
    %v1655 = vadd.f32 %v1572, %v1654
    %v1656 = vpop.f32.mrb[0].mxu0
    %1657 = vdwg.mxu0
    %1658 = vmatprep.subr.mxu0 0.0
    %v1659 = vand.u32 %v1241, 4294901760
    %1660 = vmatpush1.msra.mxu0 %v1659
    %1661 = vmatprep.subr.mxu0 0.0
    %v1662 = vand.u32 %v1242, 4294901760
    %1663 = vmatpush1.msra.mxu0 %v1662
    %1664 = vmatprep.subr.mxu0 0.0
    %v1665 = vand.u32 %v1243, 4294901760
    %1666 = vmatpush1.msra.mxu0 %v1665
    %1667 = vmatprep.subr.mxu0 0.0
    %v1668 = vand.u32 %v1244, 4294901760
    %1669 = vmatpush1.msra.mxu0 %v1668
    %1670 = vmatprep.subr.mxu0 0.0
    %1671 = vmatpush1.msra.mxu0 0.0
    %1672 = vmatprep.subr.mxu0 0.0
    %1673 = vmatpush1.msra.mxu0 0.0
    %1674 = vmatprep.subr.mxu0 0.0
    %1675 = vmatpush1.msra.mxu0 0.0
    %1676 = vmatprep.subr.mxu0 0.0
    %1677 = vmatpush1.msra.mxu0 0.0
    %1678 = vmatprep.subr.mxu0 0.0
    %1679 = vmatpush1.msra.mxu0 0.0
    %1680 = vmatprep.subr.mxu0 0.0
    %1681 = vmatpush1.msra.mxu0 0.0
    %1682 = vmatprep.subr.mxu0 0.0
    %1683 = vmatpush1.msra.mxu0 0.0
    %1684 = vmatprep.subr.mxu0 0.0
    %1685 = vmatpush1.msra.mxu0 0.0
    %1686 = vmatprep.subr.mxu0 0.0
    %1687 = vmatpush1.msra.mxu0 0.0
    %1688 = vmatprep.subr.mxu0 0.0
    %1689 = vmatpush1.msra.mxu0 0.0
    %1690 = vmatprep.subr.mxu0 0.0
    %1691 = vmatpush1.msra.mxu0 0.0
    %1692 = vmatprep.subr.mxu0 0.0
    %1693 = vmatpush1.msra.mxu0 0.0
    %1694 = vmatprep.subr.mxu0 0.0
    %1695 = vmatpush1.msra.mxu0 0.0
    %1696 = vmatprep.subr.mxu0 0.0
    %1697 = vmatpush1.msra.mxu0 0.0
    %1698 = vmatprep.subr.mxu0 0.0
    %1699 = vmatpush1.msra.mxu0 0.0
    %1700 = vmatprep.subr.mxu0 0.0
    %1701 = vmatpush1.msra.mxu0 0.0
    %1702 = vmatprep.subr.mxu0 0.0
    %1703 = vmatpush1.msra.mxu0 0.0
    %1704 = vmatprep.subr.mxu0 0.0
    %1705 = vmatpush1.msra.mxu0 0.0
    %1706 = vmatprep.subr.mxu0 0.0
    %1707 = vmatpush1.msra.mxu0 0.0
    %1708 = vmatprep.subr.mxu0 0.0
    %1709 = vmatpush1.msra.mxu0 0.0
    %1710 = vmatprep.subr.mxu0 0.0
    %1711 = vmatpush1.msra.mxu0 0.0
    %1712 = vmatprep.subr.mxu0 0.0
    %1713 = vmatpush1.msra.mxu0 0.0
    %1714 = vmatprep.subr.mxu0 0.0
    %1715 = vmatpush1.msra.mxu0 0.0
    %1716 = vmatprep.subr.mxu0 0.0
    %1717 = vmatpush1.msra.mxu0 0.0
    %1718 = vmatprep.subr.mxu0 0.0
    %1719 = vmatpush1.msra.mxu0 0.0
    %1720 = vmatprep.subr.mxu0 0.0
    %1721 = vmatpush1.msra.mxu0 0.0
    %1722 = vmatprep.subr.mxu0 0.0
    %1723 = vmatpush1.msra.mxu0 0.0
    %1724 = vmatprep.subr.mxu0 0.0
    %1725 = vmatpush1.msra.mxu0 0.0
    %1726 = vmatprep.mubr.f32.mxu0 0.0
    %v1727 = vand.u32 %v1246, 4294901760
    %1728 = vmatmul.mubr.f32.gmra.mrb[0].mxu0 %v1727
    %v1729 = vpop.f32.mrb[0].mxu0
    %v1730 = vadd.f32 %v1655, %v1729
    %v1731 = vpop.f32.mrb[0].mxu0
    %1732 = vdwg.mxu0
    %v1733 = vtanh.pop %v1730
    %1734 = vst [vmem:[#allocation7] sm:$0x1] %v1733
    // Predicated region
    $region30: #{lstm_network_forward.1} parent=1 // pred_check
      _
    $region31: #{lstm_network_forward.1} parent=1 // pred_check_branch
      %1736 = sbr.rel (0) target = $region33
    $region32: #{lstm_network_forward.1} parent=1 // pred_region
      %s1738 = ssub.s32 16, 16
      %1739 = vsyncadd [#allocation4], %s1738
      %s1741 = sshll.u32 [#allocation7], 4
      %s1742 = int_to_ptr.vmem [resolvable:$true] %s1741
      %1744 = dma.vmem_to_hbm [thread:$0]  %s1742, 16, %s4, [#allocation4]
    $region33: #{lstm_network_forward.1} parent=1 // pred_fallthru
      _
    // Predicated region
    $region34: #{lstm_network_forward.1} parent=1 // pred_check
      _
    $region35: #{lstm_network_forward.1} parent=1 // pred_check_branch
      %1746 = sbr.rel (0) target = $region37
    $region36: #{lstm_network_forward.1} parent=1 // pred_region
      _
    $region37: #{lstm_network_forward.1} parent=1 // pred_fallthru
      _
    // Predicated region
    $region38: #{lstm_network_forward.1} parent=1 // pred_check
      _
    $region39: #{lstm_network_forward.1} parent=1 // pred_check_branch
      %1748 = sbr.rel (0) target = $region41
    $region40: #{lstm_network_forward.1} parent=1 // pred_region
      %1749 = dma.done [#allocation4], 16
    $region41: #{lstm_network_forward.1} parent=1 // pred_fallthru
      _
    // Predicated region
    $region42: #{lstm_network_forward.1} parent=1 // pred_check
      _
    $region43: #{lstm_network_forward.1} parent=1 // pred_check_branch
      %1751 = sbr.rel (0) target = $region45
    $region44: #{lstm_network_forward.1} parent=1 // pred_region
      _
    $region45: #{lstm_network_forward.1} parent=1 // pred_fallthru
      _
    %1752 = vsyncpa [#allocation3], 1
    %1753 = vsyncpa [#allocation6], 1
    %1754 = vsyncpa [#allocation4], 1

</llo_original>
